<compile_context>
chip_gen: v7x
topology: tpu7x:2x2x1
jax: 0.10.0
libtpu: 0.0.40
codegen_flags: <defaults>
</compile_context>

<pallas_src>
import functools

import jax
import jax.numpy as jnp
import numpy as np
from jax.experimental import pallas as pl
from jax.experimental.pallas import tpu as pltpu


def _round_up(x, m):
    return (x + m - 1) // m * m


def _no_switch_kernel(xf_ref, w_ref, b_ref, o_ref):
    # Single MXU matmul; -1000*illegal is already folded into w_ref.
    # precision=HIGHEST -> multi-pass f32 matmul, hidden under the xf DMA
    # (memory-bound), guarantees the f32 exactness the W_eff fold relies on.
    acc = jnp.dot(xf_ref[...], w_ref[...],
                  preferred_element_type=jnp.float32,
                  precision=jax.lax.Precision.HIGHEST)
    o_ref[...] = (acc + b_ref[...]).astype(o_ref.dtype)


def build_illegal_selector(C, H, W, board_size):
    """S: (C*H*W, board_size**2); S[flat(c,h,w), (h-1)*bs + (w-1)] = 1 on interior cells."""
    S = np.zeros((C * H * W, board_size * board_size), dtype=np.float32)
    for c in range(C):
        for h in range(1, H - 1):
            for w_ in range(1, W - 1):
                flat = (c * H + h) * W + w_
                p = (h - 1) * board_size + (w_ - 1)
                S[flat, p] = 1.0
    return jnp.asarray(S)


def fold_illegal_into_weights(w, bias, C, H, W, board_size, n_pad):
    """Offline fold: W_eff = W - 1000*S (kept in f32), padded to n_pad lanes."""
    P = board_size * board_size
    S = build_illegal_selector(C, H, W, board_size)
    w_eff = w.astype(jnp.float32) - 1000.0 * S                      # (CHW, P) f32
    w_eff = jnp.pad(w_eff, ((0, 0), (0, n_pad - P)))                # (CHW, n_pad)
    b_eff = jnp.pad(bias.astype(jnp.float32).reshape(1, P),
                    ((0, 0), (0, n_pad - P)))                       # (1, n_pad)
    return w_eff, b_eff


@functools.partial(jax.jit, static_argnames=("board_size",))
def no_switch_wrapper_forward(x, w, bias, board_size):
    """x: (B, C, H, W) NCHW, H = W = board_size + 2.  Returns (B, board_size**2) f32."""
    B, C, H, W = x.shape
    assert H == board_size + 2 and W == board_size + 2
    P = board_size * board_size
    CHW = C * H * W

    # Lane-dense output: pad N = P up to a multiple of 128.
    Npad = _round_up(P, 128)
    w_eff, b_eff = fold_illegal_into_weights(w, bias, C, H, W, board_size, Npad)

    # Batch tile: big enough to amortize per-step pipeline overhead (>=512-row
    # tiles reach ~85%+ of HBM roofline), capped at 2048 so the double-buffered
    # working set (~10.5 MiB) fits v5e's 16 MiB default scoped VMEM, and sized
    # to give the grid >=4 steps when B allows so both v7x TCs run.
    TB = min(2048, max(8, _round_up(-(-B // 4), 8)))

    # No wrapper-side batch pad (would be a full extra HBM read+write of the
    # dominant xf stream whenever B % TB != 0): Pallas masks the ragged last
    # block, and each output row depends only on its own input row.
    # NOTE: x is kept in f32 — the 1000x fold amplifies any bf16 quantization
    # of x itself; if upstream already produces bf16 activations, pass them
    # through unconverted and upcast inside the kernel instead.
    xf = x.reshape(B, CHW).astype(jnp.float32)

    out = pl.pallas_call(
        _no_switch_kernel,
        out_shape=jax.ShapeDtypeStruct((B, Npad), jnp.float32),
        grid=(pl.cdiv(B, TB),),
        in_specs=[
            pl.BlockSpec((TB, CHW), lambda i: (i, 0)),
            # W_eff / bias have constant index_maps (fetched once, grid-
            # invariant); their double-buffer costs ~200 KiB which is already
            # well inside budget at TB<=2048, so the default pipeline mode is
            # kept for robustness.
            pl.BlockSpec((CHW, Npad), lambda i: (0, 0)),
            pl.BlockSpec((1, Npad), lambda i: (0, 0)),
        ],
        out_specs=pl.BlockSpec((TB, Npad), lambda i: (i, 0)),
        compiler_params=pltpu.CompilerParams(
            dimension_semantics=("parallel",)),
    )(xf, w_eff, b_eff)

    # The result leaves the jit boundary right here, so the 64-of-128 lane
    # slice must materialize; a fusing consumer should instead take the padded
    # (B, Npad) block and slice at the point of use.  The kernel's own stores
    # stay lane-dense (Npad=128, unmasked vst).
    return out[:, :P]


if __name__ == "__main__":
    board_size = 8
    B, C = 2, 4
    H = W = board_size + 2            # 10
    P = board_size * board_size       # 64
    CHW = C * H * W                   # 400

    key = jax.random.PRNGKey(0)
    kx, kw, kb = jax.random.split(key, 3)
    x = jax.random.normal(kx, (B, C, H, W), dtype=jnp.float32)
    # deterministic internal-model (linear head) parameters
    w = (jax.random.normal(kw, (CHW, P), dtype=jnp.float32)
         * (1.0 / jnp.sqrt(jnp.float32(CHW))))
    bias = jax.random.normal(kb, (P,), dtype=jnp.float32) * 0.01

    out = no_switch_wrapper_forward(x, w, bias, board_size)
    out = jax.block_until_ready(out)

    # pure-JAX reference of the original (unfolded) forward
    ref_logits = x.reshape(B, CHW) @ w + bias
    ref_illegal = 1000.0 * jnp.sum(x[:, :, 1:-1, 1:-1], axis=1).reshape(B, P)
    ref = ref_logits - ref_illegal

    np.testing.assert_allclose(np.asarray(out), np.asarray(ref), rtol=2e-4, atol=1e-2)
    print("KERNEL_OK")
</pallas_src>

<mosaic_0001>
module attributes {stable_mosaic.version = 11 : i64} {
  func.func @_no_switch_kernel(%arg0: i32, %arg1: memref<8x400xf32, #tpu.memory_space<vmem>>, %arg2: memref<400x128xf32, #tpu.memory_space<vmem>>, %arg3: memref<1x128xf32, #tpu.memory_space<vmem>>, %arg4: memref<8x128xf32, #tpu.memory_space<vmem>>) attributes {dimension_semantics = [#tpu.dimension_semantics<parallel>], iteration_bounds = array<i64: 1>, scalar_prefetch = 0 : i64, scratch_operands = 0 : i64, tpu.core_type = #tpu.core_type<tc>, window_params = [{transform_indices = @transform_0, window_bounds = array<i64: 8, 400>}, {pipeline_mode = #tpu.pipeline_mode<synchronous>, transform_indices = @transform_1, window_bounds = array<i64: 400, 128>}, {pipeline_mode = #tpu.pipeline_mode<synchronous>, transform_indices = @transform_2, window_bounds = array<i64: 1, 128>}, {transform_indices = @transform_3, window_bounds = array<i64: 8, 128>}]} {
    %c0 = arith.constant 0 : index
    %c0_0 = arith.constant 0 : index
    %0 = vector.load %arg1[%c0, %c0_0] : memref<8x400xf32, #tpu.memory_space<vmem>>, vector<8x400xf32>
    %c0_1 = arith.constant 0 : index
    %c0_2 = arith.constant 0 : index
    %1 = vector.load %arg2[%c0_1, %c0_2] : memref<400x128xf32, #tpu.memory_space<vmem>>, vector<400x128xf32>
    %cst = arith.constant dense<0.000000e+00> : vector<8x128xf32>
    %2 = tpu.matmul %0, %1, %cst {dimension_numbers = #tpu.dot_dimension_numbers<[1], [0], [0], [1], [0, 0, 1, 1], [], []>, precision = #tpu.contract_precision<fp32>} : vector<8x400xf32>, vector<400x128xf32>, vector<8x128xf32> -> vector<8x128xf32>
    %c0_3 = arith.constant 0 : index
    %c0_4 = arith.constant 0 : index
    %3 = vector.load %arg3[%c0_3, %c0_4] : memref<1x128xf32, #tpu.memory_space<vmem>>, vector<1x128xf32>
    %4 = vector.broadcast %3 : vector<1x128xf32> to vector<8x128xf32>
    %5 = arith.addf %2, %4 : vector<8x128xf32>
    %c0_5 = arith.constant 0 : index
    %c0_6 = arith.constant 0 : index
    %6 = vector.load %arg4[%c0_5, %c0_6] : memref<8x128xf32, #tpu.memory_space<vmem>>, vector<8x128xf32>
    tpu.vector_store %arg4[%c0_5, %c0_6], %5 {strides = array<i32>} : memref<8x128xf32, #tpu.memory_space<vmem>>, vector<8x128xf32>,
    return
  }
  func.func @transform_0(%arg0: i32) -> (i32, i32) {
    %c0_i32 = arith.constant 0 : i32
    %c0_i32_0 = arith.constant 0 : i32
    return %arg0, %c0_i32 : i32, i32
  }
  func.func @transform_1(%arg0: i32) -> (i32, i32) {
    %c0_i32 = arith.constant 0 : i32
    %c0_i32_0 = arith.constant 0 : i32
    %c0_i32_1 = arith.constant 0 : i32
    return %c0_i32, %c0_i32_0 : i32, i32
  }
  func.func @transform_2(%arg0: i32) -> (i32, i32) {
    %c0_i32 = arith.constant 0 : i32
    %c0_i32_0 = arith.constant 0 : i32
    %c0_i32_1 = arith.constant 0 : i32
    return %c0_i32, %c0_i32_0 : i32, i32
  }
  func.func @transform_3(%arg0: i32) -> (i32, i32) {
    %c0_i32 = arith.constant 0 : i32
    %c0_i32_0 = arith.constant 0 : i32
    return %arg0, %c0_i32 : i32, i32
  }
}

</mosaic_0001>

<llo_original>
// kernel: no_switch_wrapper_forward.1
$region0: #{no_switch_wrapper_forward.1}
  #allocation0 [shape = 'u32[]', space=smem, size = 0x4, offset = 0x4, fixed_abs, tag = 'smem constant byte address 0x4 - core index']
  #allocation1 [shape = 'u32[144,128]{1,0:T(1,128)}', space=vmem, size = 0x12000, scoped, tag = 'internal scratch']
  %s0 = inlined_call_operand.vmem [shape: f32[2,400], index: 0, kind: input, shape index: {}]
  %s1 = inlined_call_operand.vmem [shape: f32[400,128], index: 1, kind: input, shape index: {}]
  %s2 = inlined_call_operand.vmem [shape: f32[1,128], index: 2, kind: input, shape index: {}]
  %s3 = inlined_call_operand.hbm [shape: f32[2,128], index: 3, kind: output, shape index: {}]
  %s4 = sld [smem:[#allocation0]]
  $region22: #{no_switch_wrapper_forward.1} parent=0
    _
  %s6 = ssub.s32 1, %s4
  %s7 = scalar_select 0, %s6, %s4
  $region1: #{no_switch_wrapper_forward.1} parent=0
    #allocation2 [shape = 'u8[4096]{0}', space=vmem, size = 0x1000, scoped, tag = 'output window, operand 0, single buffered']
    #allocation3 [shape = 's32[1]{0}', space=sflag, size = 0x4, scoped, tag = 'scoped memory for no_switch_wrapper_forward.1']
    %8 = vsyncpa [#allocation3], 0
    // Predicated region
    $region2: #{no_switch_wrapper_forward.1} parent=1 // pred_check
      _
    $region3: #{no_switch_wrapper_forward.1} parent=1 // pred_check_branch
      %10 = sbr.rel (0) target = $region5
    $region4: #{no_switch_wrapper_forward.1} parent=1 // pred_region
      _
    $region5: #{no_switch_wrapper_forward.1} parent=1 // pred_fallthru
      _
    // Predicated region
    $region6: #{no_switch_wrapper_forward.1} parent=1 // pred_check
      _
    $region7: #{no_switch_wrapper_forward.1} parent=1 // pred_check_branch
      %12 = sbr.rel (0) target = $region9
    $region8: #{no_switch_wrapper_forward.1} parent=1 // pred_region
      _
    $region9: #{no_switch_wrapper_forward.1} parent=1 // pred_fallthru
      _
    // Predicated region
    $region10: #{no_switch_wrapper_forward.1} parent=1 // pred_check
      _
    $region11: #{no_switch_wrapper_forward.1} parent=1 // pred_check_branch
      %14 = sbr.rel (0) target = $region13
    $region12: #{no_switch_wrapper_forward.1} parent=1 // pred_region
      _
    $region13: #{no_switch_wrapper_forward.1} parent=1 // pred_fallthru
      _
    %v15 = vld [vmem:[%s0] sm:$0xff]
    %v16 = vld [vmem:[%s0 + $0x8] sm:$0xff]
    %v17 = vld [vmem:[%s0 + $0x10] sm:$0xff]
    %v18 = vld [vmem:[%s0 + $0x18] sm:$0xff]
    %v19 = vld [vmem:[%s1] sm:$0xff]
    %v20 = vld [vmem:[%s1 + $0x8] sm:$0xff]
    %v21 = vld [vmem:[%s1 + $0x10] sm:$0xff]
    %v22 = vld [vmem:[%s1 + $0x18] sm:$0xff]
    %v23 = vld [vmem:[%s1 + $0x20] sm:$0xff]
    %v24 = vld [vmem:[%s1 + $0x28] sm:$0xff]
    %v25 = vld [vmem:[%s1 + $0x30] sm:$0xff]
    %v26 = vld [vmem:[%s1 + $0x38] sm:$0xff]
    %v27 = vld [vmem:[%s1 + $0x40] sm:$0xff]
    %v28 = vld [vmem:[%s1 + $0x48] sm:$0xff]
    %v29 = vld [vmem:[%s1 + $0x50] sm:$0xff]
    %v30 = vld [vmem:[%s1 + $0x58] sm:$0xff]
    %v31 = vld [vmem:[%s1 + $0x60] sm:$0xff]
    %v32 = vld [vmem:[%s1 + $0x68] sm:$0xff]
    %v33 = vld [vmem:[%s1 + $0x70] sm:$0xff]
    %v34 = vld [vmem:[%s1 + $0x78] sm:$0xff]
    %v35 = vld [vmem:[%s1 + $0x80] sm:$0xff]
    %v36 = vld [vmem:[%s1 + $0x88] sm:$0xff]
    %v37 = vld [vmem:[%s1 + $0x90] sm:$0xff]
    %v38 = vld [vmem:[%s1 + $0x98] sm:$0xff]
    %v39 = vld [vmem:[%s1 + $0xa0] sm:$0xff]
    %v40 = vld [vmem:[%s1 + $0xa8] sm:$0xff]
    %v41 = vld [vmem:[%s1 + $0xb0] sm:$0xff]
    %v42 = vld [vmem:[%s1 + $0xb8] sm:$0xff]
    %v43 = vld [vmem:[%s1 + $0xc0] sm:$0xff]
    %v44 = vld [vmem:[%s1 + $0xc8] sm:$0xff]
    %v45 = vld [vmem:[%s1 + $0xd0] sm:$0xff]
    %v46 = vld [vmem:[%s1 + $0xd8] sm:$0xff]
    %v47 = vld [vmem:[%s1 + $0xe0] sm:$0xff]
    %v48 = vld [vmem:[%s1 + $0xe8] sm:$0xff]
    %v49 = vld [vmem:[%s1 + $0xf0] sm:$0xff]
    %v50 = vld [vmem:[%s1 + $0xf8] sm:$0xff]
    %v51 = vld [vmem:[%s1 + $0x100] sm:$0xff]
    %v52 = vld [vmem:[%s1 + $0x108] sm:$0xff]
    %v53 = vld [vmem:[%s1 + $0x110] sm:$0xff]
    %v54 = vld [vmem:[%s1 + $0x118] sm:$0xff]
    %v55 = vld [vmem:[%s1 + $0x120] sm:$0xff]
    %v56 = vld [vmem:[%s1 + $0x128] sm:$0xff]
    %v57 = vld [vmem:[%s1 + $0x130] sm:$0xff]
    %v58 = vld [vmem:[%s1 + $0x138] sm:$0xff]
    %v59 = vld [vmem:[%s1 + $0x140] sm:$0xff]
    %v60 = vld [vmem:[%s1 + $0x148] sm:$0xff]
    %v61 = vld [vmem:[%s1 + $0x150] sm:$0xff]
    %v62 = vld [vmem:[%s1 + $0x158] sm:$0xff]
    %v63 = vld [vmem:[%s1 + $0x160] sm:$0xff]
    %v64 = vld [vmem:[%s1 + $0x168] sm:$0xff]
    %v65 = vld [vmem:[%s1 + $0x170] sm:$0xff]
    %v66 = vld [vmem:[%s1 + $0x178] sm:$0xff]
    %v67 = vld [vmem:[%s1 + $0x180] sm:$0xff]
    %v68 = vld [vmem:[%s1 + $0x188] sm:$0xff]
    %v69 = vld [vmem:[%s2] sm:$0x1]
    %v71 = vlaneseq
    %v72 = vshrl.u32 %v71, 7
    %v73 = vsub.s32 0, %v72
    %v74 = vrot.slane %v69, %v73
    %v80 = vcombine.low %v15, %v16
    %v81 = vcombine.high %v15, %v16
    %v82 = vcombine.low %v17, %v18
    %v83 = vcombine.high %v17, %v18
    %v85 = vunpack.c.l.s4 1983009808
    %v86 = vunpack.c.0.s8 %v85
    %v87 = vlaneseq
    %v88 = vshrl.u32 %v87, 7
    %v89 = vsub.s32 %v86, %v88
    %v90 = vrot.slane %v80, %v89
    %v92 = vunpack.c.l.s4 1983009808
    %v93 = vunpack.c.0.s8 %v92
    %v94 = vlaneseq
    %v95 = vshrl.u32 %v94, 7
    %v96 = vsub.s32 %v93, %v95
    %v97 = vrot.slane %v81, %v96
    %v99 = vunpack.c.l.s4 1983009808
    %v100 = vunpack.c.0.s8 %v99
    %v101 = vlaneseq
    %v102 = vshrl.u32 %v101, 7
    %v103 = vsub.s32 %v100, %v102
    %v104 = vrot.slane %v82, %v103
    %v106 = vunpack.c.l.s4 1983009808
    %v107 = vunpack.c.0.s8 %v106
    %v108 = vlaneseq
    %v109 = vshrl.u32 %v108, 7
    %v110 = vsub.s32 %v107, %v109
    %v111 = vrot.slane %v83, %v110
    %v112 = vcombine.low %v90, %v104
    %v113 = vcombine.high %v90, %v104
    %v114 = vcombine.low %v97, %v111
    %v115 = vcombine.high %v97, %v111
    %vm119 = vcmask 130048
    %v120 = vsel %vm119, %v115, 0
    %122 = vmatprep.subr.mxu0 0.0
    %v123 = vand.u32 %v19, 4294901760
    %124 = vmatpush1.msra.mxu0 %v123
    %125 = vmatprep.subr.mxu0 0.0
    %v126 = vand.u32 %v20, 4294901760
    %127 = vmatpush1.msra.mxu0 %v126
    %128 = vmatprep.subr.mxu0 0.0
    %v129 = vand.u32 %v21, 4294901760
    %130 = vmatpush1.msra.mxu0 %v129
    %131 = vmatprep.subr.mxu0 0.0
    %v132 = vand.u32 %v22, 4294901760
    %133 = vmatpush1.msra.mxu0 %v132
    %134 = vmatprep.subr.mxu0 0.0
    %v135 = vand.u32 %v23, 4294901760
    %136 = vmatpush1.msra.mxu0 %v135
    %137 = vmatprep.subr.mxu0 0.0
    %v138 = vand.u32 %v24, 4294901760
    %139 = vmatpush1.msra.mxu0 %v138
    %140 = vmatprep.subr.mxu0 0.0
    %v141 = vand.u32 %v25, 4294901760
    %142 = vmatpush1.msra.mxu0 %v141
    %143 = vmatprep.subr.mxu0 0.0
    %v144 = vand.u32 %v26, 4294901760
    %145 = vmatpush1.msra.mxu0 %v144
    %146 = vmatprep.subr.mxu0 0.0
    %v147 = vand.u32 %v27, 4294901760
    %148 = vmatpush1.msra.mxu0 %v147
    %149 = vmatprep.subr.mxu0 0.0
    %v150 = vand.u32 %v28, 4294901760
    %151 = vmatpush1.msra.mxu0 %v150
    %152 = vmatprep.subr.mxu0 0.0
    %v153 = vand.u32 %v29, 4294901760
    %154 = vmatpush1.msra.mxu0 %v153
    %155 = vmatprep.subr.mxu0 0.0
    %v156 = vand.u32 %v30, 4294901760
    %157 = vmatpush1.msra.mxu0 %v156
    %158 = vmatprep.subr.mxu0 0.0
    %v159 = vand.u32 %v31, 4294901760
    %160 = vmatpush1.msra.mxu0 %v159
    %161 = vmatprep.subr.mxu0 0.0
    %v162 = vand.u32 %v32, 4294901760
    %163 = vmatpush1.msra.mxu0 %v162
    %164 = vmatprep.subr.mxu0 0.0
    %v165 = vand.u32 %v33, 4294901760
    %166 = vmatpush1.msra.mxu0 %v165
    %167 = vmatprep.subr.mxu0 0.0
    %v168 = vand.u32 %v34, 4294901760
    %169 = vmatpush1.msra.mxu0 %v168
    %170 = vmatprep.subr.mxu0 0.0
    %v171 = vand.u32 %v35, 4294901760
    %172 = vmatpush1.msra.mxu0 %v171
    %173 = vmatprep.subr.mxu0 0.0
    %v174 = vand.u32 %v36, 4294901760
    %175 = vmatpush1.msra.mxu0 %v174
    %176 = vmatprep.subr.mxu0 0.0
    %v177 = vand.u32 %v37, 4294901760
    %178 = vmatpush1.msra.mxu0 %v177
    %179 = vmatprep.subr.mxu0 0.0
    %v180 = vand.u32 %v38, 4294901760
    %181 = vmatpush1.msra.mxu0 %v180
    %182 = vmatprep.subr.mxu0 0.0
    %v183 = vand.u32 %v39, 4294901760
    %184 = vmatpush1.msra.mxu0 %v183
    %185 = vmatprep.subr.mxu0 0.0
    %v186 = vand.u32 %v40, 4294901760
    %187 = vmatpush1.msra.mxu0 %v186
    %188 = vmatprep.subr.mxu0 0.0
    %v189 = vand.u32 %v41, 4294901760
    %190 = vmatpush1.msra.mxu0 %v189
    %191 = vmatprep.subr.mxu0 0.0
    %v192 = vand.u32 %v42, 4294901760
    %193 = vmatpush1.msra.mxu0 %v192
    %194 = vmatprep.subr.mxu0 0.0
    %v195 = vand.u32 %v43, 4294901760
    %196 = vmatpush1.msra.mxu0 %v195
    %197 = vmatprep.subr.mxu0 0.0
    %v198 = vand.u32 %v44, 4294901760
    %199 = vmatpush1.msra.mxu0 %v198
    %200 = vmatprep.subr.mxu0 0.0
    %v201 = vand.u32 %v45, 4294901760
    %202 = vmatpush1.msra.mxu0 %v201
    %203 = vmatprep.subr.mxu0 0.0
    %v204 = vand.u32 %v46, 4294901760
    %205 = vmatpush1.msra.mxu0 %v204
    %206 = vmatprep.subr.mxu0 0.0
    %v207 = vand.u32 %v47, 4294901760
    %208 = vmatpush1.msra.mxu0 %v207
    %209 = vmatprep.subr.mxu0 0.0
    %v210 = vand.u32 %v48, 4294901760
    %211 = vmatpush1.msra.mxu0 %v210
    %212 = vmatprep.subr.mxu0 0.0
    %v213 = vand.u32 %v49, 4294901760
    %214 = vmatpush1.msra.mxu0 %v213
    %215 = vmatprep.subr.mxu0 0.0
    %v216 = vand.u32 %v50, 4294901760
    %217 = vmatpush1.msra.mxu0 %v216
    %v218 = vand.u32 %v113, 4294901760
    %v219 = vsub.f32 %v113, %v218
    %v220 = vand.u32 %v219, 4294901760
    %v221 = vsub.f32 %v219, %v220
    %v222 = vand.u32 %v221, 4294901760
    %223 = vmatprep.mubr.f32.mxu0 %v222
    %v224 = vand.u32 %v112, 4294901760
    %v225 = vsub.f32 %v112, %v224
    %v226 = vand.u32 %v225, 4294901760
    %v227 = vsub.f32 %v225, %v226
    %v228 = vand.u32 %v227, 4294901760
    %229 = vmatmul.mubr.f32.gmra.mrb[0].mxu0 %v228
    %v230 = vpop.f32.mrb[0].mxu0
    %v231 = vadd.f32 %v74, %v230
    %v232 = vpop.f32.mrb[0].mxu0
    %233 = vdwg.mxu0
    %234 = vmatprep.subr.mxu0 0.0
    %v235 = vand.u32 %v19, 4294901760
    %v236 = vsub.f32 %v19, %v235
    %v237 = vand.u32 %v236, 4294901760
    %v238 = vsub.f32 %v236, %v237
    %v239 = vand.u32 %v238, 4294901760
    %240 = vmatpush1.msra.mxu0 %v239
    %241 = vmatprep.subr.mxu0 0.0
    %v242 = vand.u32 %v20, 4294901760
    %v243 = vsub.f32 %v20, %v242
    %v244 = vand.u32 %v243, 4294901760
    %v245 = vsub.f32 %v243, %v244
    %v246 = vand.u32 %v245, 4294901760
    %247 = vmatpush1.msra.mxu0 %v246
    %248 = vmatprep.subr.mxu0 0.0
    %v249 = vand.u32 %v21, 4294901760
    %v250 = vsub.f32 %v21, %v249
    %v251 = vand.u32 %v250, 4294901760
    %v252 = vsub.f32 %v250, %v251
    %v253 = vand.u32 %v252, 4294901760
    %254 = vmatpush1.msra.mxu0 %v253
    %255 = vmatprep.subr.mxu0 0.0
    %v256 = vand.u32 %v22, 4294901760
    %v257 = vsub.f32 %v22, %v256
    %v258 = vand.u32 %v257, 4294901760
    %v259 = vsub.f32 %v257, %v258
    %v260 = vand.u32 %v259, 4294901760
    %261 = vmatpush1.msra.mxu0 %v260
    %262 = vmatprep.subr.mxu0 0.0
    %v263 = vand.u32 %v23, 4294901760
    %v264 = vsub.f32 %v23, %v263
    %v265 = vand.u32 %v264, 4294901760
    %v266 = vsub.f32 %v264, %v265
    %v267 = vand.u32 %v266, 4294901760
    %268 = vmatpush1.msra.mxu0 %v267
    %269 = vmatprep.subr.mxu0 0.0
    %v270 = vand.u32 %v24, 4294901760
    %v271 = vsub.f32 %v24, %v270
    %v272 = vand.u32 %v271, 4294901760
    %v273 = vsub.f32 %v271, %v272
    %v274 = vand.u32 %v273, 4294901760
    %275 = vmatpush1.msra.mxu0 %v274
    %276 = vmatprep.subr.mxu0 0.0
    %v277 = vand.u32 %v25, 4294901760
    %v278 = vsub.f32 %v25, %v277
    %v279 = vand.u32 %v278, 4294901760
    %v280 = vsub.f32 %v278, %v279
    %v281 = vand.u32 %v280, 4294901760
    %282 = vmatpush1.msra.mxu0 %v281
    %283 = vmatprep.subr.mxu0 0.0
    %v284 = vand.u32 %v26, 4294901760
    %v285 = vsub.f32 %v26, %v284
    %v286 = vand.u32 %v285, 4294901760
    %v287 = vsub.f32 %v285, %v286
    %v288 = vand.u32 %v287, 4294901760
    %289 = vmatpush1.msra.mxu0 %v288
    %290 = vmatprep.subr.mxu0 0.0
    %v291 = vand.u32 %v27, 4294901760
    %v292 = vsub.f32 %v27, %v291
    %v293 = vand.u32 %v292, 4294901760
    %v294 = vsub.f32 %v292, %v293
    %v295 = vand.u32 %v294, 4294901760
    %296 = vmatpush1.msra.mxu0 %v295
    %297 = vmatprep.subr.mxu0 0.0
    %v298 = vand.u32 %v28, 4294901760
    %v299 = vsub.f32 %v28, %v298
    %v300 = vand.u32 %v299, 4294901760
    %v301 = vsub.f32 %v299, %v300
    %v302 = vand.u32 %v301, 4294901760
    %303 = vmatpush1.msra.mxu0 %v302
    %304 = vmatprep.subr.mxu0 0.0
    %v305 = vand.u32 %v29, 4294901760
    %v306 = vsub.f32 %v29, %v305
    %v307 = vand.u32 %v306, 4294901760
    %v308 = vsub.f32 %v306, %v307
    %v309 = vand.u32 %v308, 4294901760
    %310 = vmatpush1.msra.mxu0 %v309
    %311 = vmatprep.subr.mxu0 0.0
    %v312 = vand.u32 %v30, 4294901760
    %v313 = vsub.f32 %v30, %v312
    %v314 = vand.u32 %v313, 4294901760
    %v315 = vsub.f32 %v313, %v314
    %v316 = vand.u32 %v315, 4294901760
    %317 = vmatpush1.msra.mxu0 %v316
    %318 = vmatprep.subr.mxu0 0.0
    %v319 = vand.u32 %v31, 4294901760
    %v320 = vsub.f32 %v31, %v319
    %v321 = vand.u32 %v320, 4294901760
    %v322 = vsub.f32 %v320, %v321
    %v323 = vand.u32 %v322, 4294901760
    %324 = vmatpush1.msra.mxu0 %v323
    %325 = vmatprep.subr.mxu0 0.0
    %v326 = vand.u32 %v32, 4294901760
    %v327 = vsub.f32 %v32, %v326
    %v328 = vand.u32 %v327, 4294901760
    %v329 = vsub.f32 %v327, %v328
    %v330 = vand.u32 %v329, 4294901760
    %331 = vmatpush1.msra.mxu0 %v330
    %332 = vmatprep.subr.mxu0 0.0
    %v333 = vand.u32 %v33, 4294901760
    %v334 = vsub.f32 %v33, %v333
    %v335 = vand.u32 %v334, 4294901760
    %v336 = vsub.f32 %v334, %v335
    %v337 = vand.u32 %v336, 4294901760
    %338 = vmatpush1.msra.mxu0 %v337
    %339 = vmatprep.subr.mxu0 0.0
    %v340 = vand.u32 %v34, 4294901760
    %v341 = vsub.f32 %v34, %v340
    %v342 = vand.u32 %v341, 4294901760
    %v343 = vsub.f32 %v341, %v342
    %v344 = vand.u32 %v343, 4294901760
    %345 = vmatpush1.msra.mxu0 %v344
    %346 = vmatprep.subr.mxu0 0.0
    %v347 = vand.u32 %v35, 4294901760
    %v348 = vsub.f32 %v35, %v347
    %v349 = vand.u32 %v348, 4294901760
    %v350 = vsub.f32 %v348, %v349
    %v351 = vand.u32 %v350, 4294901760
    %352 = vmatpush1.msra.mxu0 %v351
    %353 = vmatprep.subr.mxu0 0.0
    %v354 = vand.u32 %v36, 4294901760
    %v355 = vsub.f32 %v36, %v354
    %v356 = vand.u32 %v355, 4294901760
    %v357 = vsub.f32 %v355, %v356
    %v358 = vand.u32 %v357, 4294901760
    %359 = vmatpush1.msra.mxu0 %v358
    %360 = vmatprep.subr.mxu0 0.0
    %v361 = vand.u32 %v37, 4294901760
    %v362 = vsub.f32 %v37, %v361
    %v363 = vand.u32 %v362, 4294901760
    %v364 = vsub.f32 %v362, %v363
    %v365 = vand.u32 %v364, 4294901760
    %366 = vmatpush1.msra.mxu0 %v365
    %367 = vmatprep.subr.mxu0 0.0
    %v368 = vand.u32 %v38, 4294901760
    %v369 = vsub.f32 %v38, %v368
    %v370 = vand.u32 %v369, 4294901760
    %v371 = vsub.f32 %v369, %v370
    %v372 = vand.u32 %v371, 4294901760
    %373 = vmatpush1.msra.mxu0 %v372
    %374 = vmatprep.subr.mxu0 0.0
    %v375 = vand.u32 %v39, 4294901760
    %v376 = vsub.f32 %v39, %v375
    %v377 = vand.u32 %v376, 4294901760
    %v378 = vsub.f32 %v376, %v377
    %v379 = vand.u32 %v378, 4294901760
    %380 = vmatpush1.msra.mxu0 %v379
    %381 = vmatprep.subr.mxu0 0.0
    %v382 = vand.u32 %v40, 4294901760
    %v383 = vsub.f32 %v40, %v382
    %v384 = vand.u32 %v383, 4294901760
    %v385 = vsub.f32 %v383, %v384
    %v386 = vand.u32 %v385, 4294901760
    %387 = vmatpush1.msra.mxu0 %v386
    %388 = vmatprep.subr.mxu0 0.0
    %v389 = vand.u32 %v41, 4294901760
    %v390 = vsub.f32 %v41, %v389
    %v391 = vand.u32 %v390, 4294901760
    %v392 = vsub.f32 %v390, %v391
    %v393 = vand.u32 %v392, 4294901760
    %394 = vmatpush1.msra.mxu0 %v393
    %395 = vmatprep.subr.mxu0 0.0
    %v396 = vand.u32 %v42, 4294901760
    %v397 = vsub.f32 %v42, %v396
    %v398 = vand.u32 %v397, 4294901760
    %v399 = vsub.f32 %v397, %v398
    %v400 = vand.u32 %v399, 4294901760
    %401 = vmatpush1.msra.mxu0 %v400
    %402 = vmatprep.subr.mxu0 0.0
    %v403 = vand.u32 %v43, 4294901760
    %v404 = vsub.f32 %v43, %v403
    %v405 = vand.u32 %v404, 4294901760
    %v406 = vsub.f32 %v404, %v405
    %v407 = vand.u32 %v406, 4294901760
    %408 = vmatpush1.msra.mxu0 %v407
    %409 = vmatprep.subr.mxu0 0.0
    %v410 = vand.u32 %v44, 4294901760
    %v411 = vsub.f32 %v44, %v410
    %v412 = vand.u32 %v411, 4294901760
    %v413 = vsub.f32 %v411, %v412
    %v414 = vand.u32 %v413, 4294901760
    %415 = vmatpush1.msra.mxu0 %v414
    %416 = vmatprep.subr.mxu0 0.0
    %v417 = vand.u32 %v45, 4294901760
    %v418 = vsub.f32 %v45, %v417
    %v419 = vand.u32 %v418, 4294901760
    %v420 = vsub.f32 %v418, %v419
    %v421 = vand.u32 %v420, 4294901760
    %422 = vmatpush1.msra.mxu0 %v421
    %423 = vmatprep.subr.mxu0 0.0
    %v424 = vand.u32 %v46, 4294901760
    %v425 = vsub.f32 %v46, %v424
    %v426 = vand.u32 %v425, 4294901760
    %v427 = vsub.f32 %v425, %v426
    %v428 = vand.u32 %v427, 4294901760
    %429 = vmatpush1.msra.mxu0 %v428
    %430 = vmatprep.subr.mxu0 0.0
    %v431 = vand.u32 %v47, 4294901760
    %v432 = vsub.f32 %v47, %v431
    %v433 = vand.u32 %v432, 4294901760
    %v434 = vsub.f32 %v432, %v433
    %v435 = vand.u32 %v434, 4294901760
    %436 = vmatpush1.msra.mxu0 %v435
    %437 = vmatprep.subr.mxu0 0.0
    %v438 = vand.u32 %v48, 4294901760
    %v439 = vsub.f32 %v48, %v438
    %v440 = vand.u32 %v439, 4294901760
    %v441 = vsub.f32 %v439, %v440
    %v442 = vand.u32 %v441, 4294901760
    %443 = vmatpush1.msra.mxu0 %v442
    %444 = vmatprep.subr.mxu0 0.0
    %v445 = vand.u32 %v49, 4294901760
    %v446 = vsub.f32 %v49, %v445
    %v447 = vand.u32 %v446, 4294901760
    %v448 = vsub.f32 %v446, %v447
    %v449 = vand.u32 %v448, 4294901760
    %450 = vmatpush1.msra.mxu0 %v449
    %451 = vmatprep.subr.mxu0 0.0
    %v452 = vand.u32 %v50, 4294901760
    %v453 = vsub.f32 %v50, %v452
    %v454 = vand.u32 %v453, 4294901760
    %v455 = vsub.f32 %v453, %v454
    %v456 = vand.u32 %v455, 4294901760
    %457 = vmatpush1.msra.mxu0 %v456
    %v458 = vand.u32 %v113, 4294901760
    %459 = vmatprep.mubr.f32.mxu0 %v458
    %v460 = vand.u32 %v112, 4294901760
    %461 = vmatmul.mubr.f32.gmra.mrb[0].mxu0 %v460
    %v462 = vpop.f32.mrb[0].mxu0
    %v463 = vadd.f32 %v231, %v462
    %v464 = vpop.f32.mrb[0].mxu0
    %465 = vdwg.mxu0
    %466 = vmatprep.subr.mxu0 0.0
    %v467 = vand.u32 %v19, 4294901760
    %v468 = vsub.f32 %v19, %v467
    %469 = vmatpush1.msra.mxu0 %v468
    %470 = vmatprep.subr.mxu0 0.0
    %v471 = vand.u32 %v20, 4294901760
    %v472 = vsub.f32 %v20, %v471
    %473 = vmatpush1.msra.mxu0 %v472
    %474 = vmatprep.subr.mxu0 0.0
    %v475 = vand.u32 %v21, 4294901760
    %v476 = vsub.f32 %v21, %v475
    %477 = vmatpush1.msra.mxu0 %v476
    %478 = vmatprep.subr.mxu0 0.0
    %v479 = vand.u32 %v22, 4294901760
    %v480 = vsub.f32 %v22, %v479
    %481 = vmatpush1.msra.mxu0 %v480
    %482 = vmatprep.subr.mxu0 0.0
    %v483 = vand.u32 %v23, 4294901760
    %v484 = vsub.f32 %v23, %v483
    %485 = vmatpush1.msra.mxu0 %v484
    %486 = vmatprep.subr.mxu0 0.0
    %v487 = vand.u32 %v24, 4294901760
    %v488 = vsub.f32 %v24, %v487
    %489 = vmatpush1.msra.mxu0 %v488
    %490 = vmatprep.subr.mxu0 0.0
    %v491 = vand.u32 %v25, 4294901760
    %v492 = vsub.f32 %v25, %v491
    %493 = vmatpush1.msra.mxu0 %v492
    %494 = vmatprep.subr.mxu0 0.0
    %v495 = vand.u32 %v26, 4294901760
    %v496 = vsub.f32 %v26, %v495
    %497 = vmatpush1.msra.mxu0 %v496
    %498 = vmatprep.subr.mxu0 0.0
    %v499 = vand.u32 %v27, 4294901760
    %v500 = vsub.f32 %v27, %v499
    %501 = vmatpush1.msra.mxu0 %v500
    %502 = vmatprep.subr.mxu0 0.0
    %v503 = vand.u32 %v28, 4294901760
    %v504 = vsub.f32 %v28, %v503
    %505 = vmatpush1.msra.mxu0 %v504
    %506 = vmatprep.subr.mxu0 0.0
    %v507 = vand.u32 %v29, 4294901760
    %v508 = vsub.f32 %v29, %v507
    %509 = vmatpush1.msra.mxu0 %v508
    %510 = vmatprep.subr.mxu0 0.0
    %v511 = vand.u32 %v30, 4294901760
    %v512 = vsub.f32 %v30, %v511
    %513 = vmatpush1.msra.mxu0 %v512
    %514 = vmatprep.subr.mxu0 0.0
    %v515 = vand.u32 %v31, 4294901760
    %v516 = vsub.f32 %v31, %v515
    %517 = vmatpush1.msra.mxu0 %v516
    %518 = vmatprep.subr.mxu0 0.0
    %v519 = vand.u32 %v32, 4294901760
    %v520 = vsub.f32 %v32, %v519
    %521 = vmatpush1.msra.mxu0 %v520
    %522 = vmatprep.subr.mxu0 0.0
    %v523 = vand.u32 %v33, 4294901760
    %v524 = vsub.f32 %v33, %v523
    %525 = vmatpush1.msra.mxu0 %v524
    %526 = vmatprep.subr.mxu0 0.0
    %v527 = vand.u32 %v34, 4294901760
    %v528 = vsub.f32 %v34, %v527
    %529 = vmatpush1.msra.mxu0 %v528
    %530 = vmatprep.subr.mxu0 0.0
    %v531 = vand.u32 %v35, 4294901760
    %v532 = vsub.f32 %v35, %v531
    %533 = vmatpush1.msra.mxu0 %v532
    %534 = vmatprep.subr.mxu0 0.0
    %v535 = vand.u32 %v36, 4294901760
    %v536 = vsub.f32 %v36, %v535
    %537 = vmatpush1.msra.mxu0 %v536
    %538 = vmatprep.subr.mxu0 0.0
    %v539 = vand.u32 %v37, 4294901760
    %v540 = vsub.f32 %v37, %v539
    %541 = vmatpush1.msra.mxu0 %v540
    %542 = vmatprep.subr.mxu0 0.0
    %v543 = vand.u32 %v38, 4294901760
    %v544 = vsub.f32 %v38, %v543
    %545 = vmatpush1.msra.mxu0 %v544
    %546 = vmatprep.subr.mxu0 0.0
    %v547 = vand.u32 %v39, 4294901760
    %v548 = vsub.f32 %v39, %v547
    %549 = vmatpush1.msra.mxu0 %v548
    %550 = vmatprep.subr.mxu0 0.0
    %v551 = vand.u32 %v40, 4294901760
    %v552 = vsub.f32 %v40, %v551
    %553 = vmatpush1.msra.mxu0 %v552
    %554 = vmatprep.subr.mxu0 0.0
    %v555 = vand.u32 %v41, 4294901760
    %v556 = vsub.f32 %v41, %v555
    %557 = vmatpush1.msra.mxu0 %v556
    %558 = vmatprep.subr.mxu0 0.0
    %v559 = vand.u32 %v42, 4294901760
    %v560 = vsub.f32 %v42, %v559
    %561 = vmatpush1.msra.mxu0 %v560
    %562 = vmatprep.subr.mxu0 0.0
    %v563 = vand.u32 %v43, 4294901760
    %v564 = vsub.f32 %v43, %v563
    %565 = vmatpush1.msra.mxu0 %v564
    %566 = vmatprep.subr.mxu0 0.0
    %v567 = vand.u32 %v44, 4294901760
    %v568 = vsub.f32 %v44, %v567
    %569 = vmatpush1.msra.mxu0 %v568
    %570 = vmatprep.subr.mxu0 0.0
    %v571 = vand.u32 %v45, 4294901760
    %v572 = vsub.f32 %v45, %v571
    %573 = vmatpush1.msra.mxu0 %v572
    %574 = vmatprep.subr.mxu0 0.0
    %v575 = vand.u32 %v46, 4294901760
    %v576 = vsub.f32 %v46, %v575
    %577 = vmatpush1.msra.mxu0 %v576
    %578 = vmatprep.subr.mxu0 0.0
    %v579 = vand.u32 %v47, 4294901760
    %v580 = vsub.f32 %v47, %v579
    %581 = vmatpush1.msra.mxu0 %v580
    %582 = vmatprep.subr.mxu0 0.0
    %v583 = vand.u32 %v48, 4294901760
    %v584 = vsub.f32 %v48, %v583
    %585 = vmatpush1.msra.mxu0 %v584
    %586 = vmatprep.subr.mxu0 0.0
    %v587 = vand.u32 %v49, 4294901760
    %v588 = vsub.f32 %v49, %v587
    %589 = vmatpush1.msra.mxu0 %v588
    %590 = vmatprep.subr.mxu0 0.0
    %v591 = vand.u32 %v50, 4294901760
    %v592 = vsub.f32 %v50, %v591
    %593 = vmatpush1.msra.mxu0 %v592
    %v594 = vand.u32 %v113, 4294901760
    %v595 = vsub.f32 %v113, %v594
    %596 = vmatprep.mubr.f32.mxu0 %v595
    %v597 = vand.u32 %v112, 4294901760
    %v598 = vsub.f32 %v112, %v597
    %599 = vmatmul.mubr.f32.gmra.mrb[0].mxu0 %v598
    %v600 = vpop.f32.mrb[0].mxu0
    %v601 = vadd.f32 %v463, %v600
    %v602 = vpop.f32.mrb[0].mxu0
    %603 = vdwg.mxu0
    %604 = vmatprep.subr.mxu0 0.0
    %v605 = vand.u32 %v19, 4294901760
    %606 = vmatpush1.msra.mxu0 %v605
    %607 = vmatprep.subr.mxu0 0.0
    %v608 = vand.u32 %v20, 4294901760
    %609 = vmatpush1.msra.mxu0 %v608
    %610 = vmatprep.subr.mxu0 0.0
    %v611 = vand.u32 %v21, 4294901760
    %612 = vmatpush1.msra.mxu0 %v611
    %613 = vmatprep.subr.mxu0 0.0
    %v614 = vand.u32 %v22, 4294901760
    %615 = vmatpush1.msra.mxu0 %v614
    %616 = vmatprep.subr.mxu0 0.0
    %v617 = vand.u32 %v23, 4294901760
    %618 = vmatpush1.msra.mxu0 %v617
    %619 = vmatprep.subr.mxu0 0.0
    %v620 = vand.u32 %v24, 4294901760
    %621 = vmatpush1.msra.mxu0 %v620
    %622 = vmatprep.subr.mxu0 0.0
    %v623 = vand.u32 %v25, 4294901760
    %624 = vmatpush1.msra.mxu0 %v623
    %625 = vmatprep.subr.mxu0 0.0
    %v626 = vand.u32 %v26, 4294901760
    %627 = vmatpush1.msra.mxu0 %v626
    %628 = vmatprep.subr.mxu0 0.0
    %v629 = vand.u32 %v27, 4294901760
    %630 = vmatpush1.msra.mxu0 %v629
    %631 = vmatprep.subr.mxu0 0.0
    %v632 = vand.u32 %v28, 4294901760
    %633 = vmatpush1.msra.mxu0 %v632
    %634 = vmatprep.subr.mxu0 0.0
    %v635 = vand.u32 %v29, 4294901760
    %636 = vmatpush1.msra.mxu0 %v635
    %637 = vmatprep.subr.mxu0 0.0
    %v638 = vand.u32 %v30, 4294901760
    %639 = vmatpush1.msra.mxu0 %v638
    %640 = vmatprep.subr.mxu0 0.0
    %v641 = vand.u32 %v31, 4294901760
    %642 = vmatpush1.msra.mxu0 %v641
    %643 = vmatprep.subr.mxu0 0.0
    %v644 = vand.u32 %v32, 4294901760
    %645 = vmatpush1.msra.mxu0 %v644
    %646 = vmatprep.subr.mxu0 0.0
    %v647 = vand.u32 %v33, 4294901760
    %648 = vmatpush1.msra.mxu0 %v647
    %649 = vmatprep.subr.mxu0 0.0
    %v650 = vand.u32 %v34, 4294901760
    %651 = vmatpush1.msra.mxu0 %v650
    %652 = vmatprep.subr.mxu0 0.0
    %v653 = vand.u32 %v35, 4294901760
    %654 = vmatpush1.msra.mxu0 %v653
    %655 = vmatprep.subr.mxu0 0.0
    %v656 = vand.u32 %v36, 4294901760
    %657 = vmatpush1.msra.mxu0 %v656
    %658 = vmatprep.subr.mxu0 0.0
    %v659 = vand.u32 %v37, 4294901760
    %660 = vmatpush1.msra.mxu0 %v659
    %661 = vmatprep.subr.mxu0 0.0
    %v662 = vand.u32 %v38, 4294901760
    %663 = vmatpush1.msra.mxu0 %v662
    %664 = vmatprep.subr.mxu0 0.0
    %v665 = vand.u32 %v39, 4294901760
    %666 = vmatpush1.msra.mxu0 %v665
    %667 = vmatprep.subr.mxu0 0.0
    %v668 = vand.u32 %v40, 4294901760
    %669 = vmatpush1.msra.mxu0 %v668
    %670 = vmatprep.subr.mxu0 0.0
    %v671 = vand.u32 %v41, 4294901760
    %672 = vmatpush1.msra.mxu0 %v671
    %673 = vmatprep.subr.mxu0 0.0
    %v674 = vand.u32 %v42, 4294901760
    %675 = vmatpush1.msra.mxu0 %v674
    %676 = vmatprep.subr.mxu0 0.0
    %v677 = vand.u32 %v43, 4294901760
    %678 = vmatpush1.msra.mxu0 %v677
    %679 = vmatprep.subr.mxu0 0.0
    %v680 = vand.u32 %v44, 4294901760
    %681 = vmatpush1.msra.mxu0 %v680
    %682 = vmatprep.subr.mxu0 0.0
    %v683 = vand.u32 %v45, 4294901760
    %684 = vmatpush1.msra.mxu0 %v683
    %685 = vmatprep.subr.mxu0 0.0
    %v686 = vand.u32 %v46, 4294901760
    %687 = vmatpush1.msra.mxu0 %v686
    %688 = vmatprep.subr.mxu0 0.0
    %v689 = vand.u32 %v47, 4294901760
    %690 = vmatpush1.msra.mxu0 %v689
    %691 = vmatprep.subr.mxu0 0.0
    %v692 = vand.u32 %v48, 4294901760
    %693 = vmatpush1.msra.mxu0 %v692
    %694 = vmatprep.subr.mxu0 0.0
    %v695 = vand.u32 %v49, 4294901760
    %696 = vmatpush1.msra.mxu0 %v695
    %697 = vmatprep.subr.mxu0 0.0
    %v698 = vand.u32 %v50, 4294901760
    %699 = vmatpush1.msra.mxu0 %v698
    %v700 = vand.u32 %v113, 4294901760
    %v701 = vsub.f32 %v113, %v700
    %v702 = vand.u32 %v701, 4294901760
    %703 = vmatprep.mubr.f32.mxu0 %v702
    %v704 = vand.u32 %v112, 4294901760
    %v705 = vsub.f32 %v112, %v704
    %v706 = vand.u32 %v705, 4294901760
    %707 = vmatmul.mubr.f32.gmra.mrb[0].mxu0 %v706
    %v708 = vpop.f32.mrb[0].mxu0
    %v709 = vadd.f32 %v601, %v708
    %v710 = vpop.f32.mrb[0].mxu0
    %711 = vdwg.mxu0
    %712 = vmatprep.subr.mxu0 0.0
    %v713 = vand.u32 %v19, 4294901760
    %v714 = vsub.f32 %v19, %v713
    %v715 = vand.u32 %v714, 4294901760
    %716 = vmatpush1.msra.mxu0 %v715
    %717 = vmatprep.subr.mxu0 0.0
    %v718 = vand.u32 %v20, 4294901760
    %v719 = vsub.f32 %v20, %v718
    %v720 = vand.u32 %v719, 4294901760
    %721 = vmatpush1.msra.mxu0 %v720
    %722 = vmatprep.subr.mxu0 0.0
    %v723 = vand.u32 %v21, 4294901760
    %v724 = vsub.f32 %v21, %v723
    %v725 = vand.u32 %v724, 4294901760
    %726 = vmatpush1.msra.mxu0 %v725
    %727 = vmatprep.subr.mxu0 0.0
    %v728 = vand.u32 %v22, 4294901760
    %v729 = vsub.f32 %v22, %v728
    %v730 = vand.u32 %v729, 4294901760
    %731 = vmatpush1.msra.mxu0 %v730
    %732 = vmatprep.subr.mxu0 0.0
    %v733 = vand.u32 %v23, 4294901760
    %v734 = vsub.f32 %v23, %v733
    %v735 = vand.u32 %v734, 4294901760
    %736 = vmatpush1.msra.mxu0 %v735
    %737 = vmatprep.subr.mxu0 0.0
    %v738 = vand.u32 %v24, 4294901760
    %v739 = vsub.f32 %v24, %v738
    %v740 = vand.u32 %v739, 4294901760
    %741 = vmatpush1.msra.mxu0 %v740
    %742 = vmatprep.subr.mxu0 0.0
    %v743 = vand.u32 %v25, 4294901760
    %v744 = vsub.f32 %v25, %v743
    %v745 = vand.u32 %v744, 4294901760
    %746 = vmatpush1.msra.mxu0 %v745
    %747 = vmatprep.subr.mxu0 0.0
    %v748 = vand.u32 %v26, 4294901760
    %v749 = vsub.f32 %v26, %v748
    %v750 = vand.u32 %v749, 4294901760
    %751 = vmatpush1.msra.mxu0 %v750
    %752 = vmatprep.subr.mxu0 0.0
    %v753 = vand.u32 %v27, 4294901760
    %v754 = vsub.f32 %v27, %v753
    %v755 = vand.u32 %v754, 4294901760
    %756 = vmatpush1.msra.mxu0 %v755
    %757 = vmatprep.subr.mxu0 0.0
    %v758 = vand.u32 %v28, 4294901760
    %v759 = vsub.f32 %v28, %v758
    %v760 = vand.u32 %v759, 4294901760
    %761 = vmatpush1.msra.mxu0 %v760
    %762 = vmatprep.subr.mxu0 0.0
    %v763 = vand.u32 %v29, 4294901760
    %v764 = vsub.f32 %v29, %v763
    %v765 = vand.u32 %v764, 4294901760
    %766 = vmatpush1.msra.mxu0 %v765
    %767 = vmatprep.subr.mxu0 0.0
    %v768 = vand.u32 %v30, 4294901760
    %v769 = vsub.f32 %v30, %v768
    %v770 = vand.u32 %v769, 4294901760
    %771 = vmatpush1.msra.mxu0 %v770
    %772 = vmatprep.subr.mxu0 0.0
    %v773 = vand.u32 %v31, 4294901760
    %v774 = vsub.f32 %v31, %v773
    %v775 = vand.u32 %v774, 4294901760
    %776 = vmatpush1.msra.mxu0 %v775
    %777 = vmatprep.subr.mxu0 0.0
    %v778 = vand.u32 %v32, 4294901760
    %v779 = vsub.f32 %v32, %v778
    %v780 = vand.u32 %v779, 4294901760
    %781 = vmatpush1.msra.mxu0 %v780
    %782 = vmatprep.subr.mxu0 0.0
    %v783 = vand.u32 %v33, 4294901760
    %v784 = vsub.f32 %v33, %v783
    %v785 = vand.u32 %v784, 4294901760
    %786 = vmatpush1.msra.mxu0 %v785
    %787 = vmatprep.subr.mxu0 0.0
    %v788 = vand.u32 %v34, 4294901760
    %v789 = vsub.f32 %v34, %v788
    %v790 = vand.u32 %v789, 4294901760
    %791 = vmatpush1.msra.mxu0 %v790
    %792 = vmatprep.subr.mxu0 0.0
    %v793 = vand.u32 %v35, 4294901760
    %v794 = vsub.f32 %v35, %v793
    %v795 = vand.u32 %v794, 4294901760
    %796 = vmatpush1.msra.mxu0 %v795
    %797 = vmatprep.subr.mxu0 0.0
    %v798 = vand.u32 %v36, 4294901760
    %v799 = vsub.f32 %v36, %v798
    %v800 = vand.u32 %v799, 4294901760
    %801 = vmatpush1.msra.mxu0 %v800
    %802 = vmatprep.subr.mxu0 0.0
    %v803 = vand.u32 %v37, 4294901760
    %v804 = vsub.f32 %v37, %v803
    %v805 = vand.u32 %v804, 4294901760
    %806 = vmatpush1.msra.mxu0 %v805
    %807 = vmatprep.subr.mxu0 0.0
    %v808 = vand.u32 %v38, 4294901760
    %v809 = vsub.f32 %v38, %v808
    %v810 = vand.u32 %v809, 4294901760
    %811 = vmatpush1.msra.mxu0 %v810
    %812 = vmatprep.subr.mxu0 0.0
    %v813 = vand.u32 %v39, 4294901760
    %v814 = vsub.f32 %v39, %v813
    %v815 = vand.u32 %v814, 4294901760
    %816 = vmatpush1.msra.mxu0 %v815
    %817 = vmatprep.subr.mxu0 0.0
    %v818 = vand.u32 %v40, 4294901760
    %v819 = vsub.f32 %v40, %v818
    %v820 = vand.u32 %v819, 4294901760
    %821 = vmatpush1.msra.mxu0 %v820
    %822 = vmatprep.subr.mxu0 0.0
    %v823 = vand.u32 %v41, 4294901760
    %v824 = vsub.f32 %v41, %v823
    %v825 = vand.u32 %v824, 4294901760
    %826 = vmatpush1.msra.mxu0 %v825
    %827 = vmatprep.subr.mxu0 0.0
    %v828 = vand.u32 %v42, 4294901760
    %v829 = vsub.f32 %v42, %v828
    %v830 = vand.u32 %v829, 4294901760
    %831 = vmatpush1.msra.mxu0 %v830
    %832 = vmatprep.subr.mxu0 0.0
    %v833 = vand.u32 %v43, 4294901760
    %v834 = vsub.f32 %v43, %v833
    %v835 = vand.u32 %v834, 4294901760
    %836 = vmatpush1.msra.mxu0 %v835
    %837 = vmatprep.subr.mxu0 0.0
    %v838 = vand.u32 %v44, 4294901760
    %v839 = vsub.f32 %v44, %v838
    %v840 = vand.u32 %v839, 4294901760
    %841 = vmatpush1.msra.mxu0 %v840
    %842 = vmatprep.subr.mxu0 0.0
    %v843 = vand.u32 %v45, 4294901760
    %v844 = vsub.f32 %v45, %v843
    %v845 = vand.u32 %v844, 4294901760
    %846 = vmatpush1.msra.mxu0 %v845
    %847 = vmatprep.subr.mxu0 0.0
    %v848 = vand.u32 %v46, 4294901760
    %v849 = vsub.f32 %v46, %v848
    %v850 = vand.u32 %v849, 4294901760
    %851 = vmatpush1.msra.mxu0 %v850
    %852 = vmatprep.subr.mxu0 0.0
    %v853 = vand.u32 %v47, 4294901760
    %v854 = vsub.f32 %v47, %v853
    %v855 = vand.u32 %v854, 4294901760
    %856 = vmatpush1.msra.mxu0 %v855
    %857 = vmatprep.subr.mxu0 0.0
    %v858 = vand.u32 %v48, 4294901760
    %v859 = vsub.f32 %v48, %v858
    %v860 = vand.u32 %v859, 4294901760
    %861 = vmatpush1.msra.mxu0 %v860
    %862 = vmatprep.subr.mxu0 0.0
    %v863 = vand.u32 %v49, 4294901760
    %v864 = vsub.f32 %v49, %v863
    %v865 = vand.u32 %v864, 4294901760
    %866 = vmatpush1.msra.mxu0 %v865
    %867 = vmatprep.subr.mxu0 0.0
    %v868 = vand.u32 %v50, 4294901760
    %v869 = vsub.f32 %v50, %v868
    %v870 = vand.u32 %v869, 4294901760
    %871 = vmatpush1.msra.mxu0 %v870
    %v872 = vand.u32 %v113, 4294901760
    %873 = vmatprep.mubr.f32.mxu0 %v872
    %v874 = vand.u32 %v112, 4294901760
    %875 = vmatmul.mubr.f32.gmra.mrb[0].mxu0 %v874
    %v876 = vpop.f32.mrb[0].mxu0
    %v877 = vadd.f32 %v709, %v876
    %v878 = vpop.f32.mrb[0].mxu0
    %879 = vdwg.mxu0
    %880 = vmatprep.subr.mxu0 0.0
    %v881 = vand.u32 %v19, 4294901760
    %882 = vmatpush1.msra.mxu0 %v881
    %883 = vmatprep.subr.mxu0 0.0
    %v884 = vand.u32 %v20, 4294901760
    %885 = vmatpush1.msra.mxu0 %v884
    %886 = vmatprep.subr.mxu0 0.0
    %v887 = vand.u32 %v21, 4294901760
    %888 = vmatpush1.msra.mxu0 %v887
    %889 = vmatprep.subr.mxu0 0.0
    %v890 = vand.u32 %v22, 4294901760
    %891 = vmatpush1.msra.mxu0 %v890
    %892 = vmatprep.subr.mxu0 0.0
    %v893 = vand.u32 %v23, 4294901760
    %894 = vmatpush1.msra.mxu0 %v893
    %895 = vmatprep.subr.mxu0 0.0
    %v896 = vand.u32 %v24, 4294901760
    %897 = vmatpush1.msra.mxu0 %v896
    %898 = vmatprep.subr.mxu0 0.0
    %v899 = vand.u32 %v25, 4294901760
    %900 = vmatpush1.msra.mxu0 %v899
    %901 = vmatprep.subr.mxu0 0.0
    %v902 = vand.u32 %v26, 4294901760
    %903 = vmatpush1.msra.mxu0 %v902
    %904 = vmatprep.subr.mxu0 0.0
    %v905 = vand.u32 %v27, 4294901760
    %906 = vmatpush1.msra.mxu0 %v905
    %907 = vmatprep.subr.mxu0 0.0
    %v908 = vand.u32 %v28, 4294901760
    %909 = vmatpush1.msra.mxu0 %v908
    %910 = vmatprep.subr.mxu0 0.0
    %v911 = vand.u32 %v29, 4294901760
    %912 = vmatpush1.msra.mxu0 %v911
    %913 = vmatprep.subr.mxu0 0.0
    %v914 = vand.u32 %v30, 4294901760
    %915 = vmatpush1.msra.mxu0 %v914
    %916 = vmatprep.subr.mxu0 0.0
    %v917 = vand.u32 %v31, 4294901760
    %918 = vmatpush1.msra.mxu0 %v917
    %919 = vmatprep.subr.mxu0 0.0
    %v920 = vand.u32 %v32, 4294901760
    %921 = vmatpush1.msra.mxu0 %v920
    %922 = vmatprep.subr.mxu0 0.0
    %v923 = vand.u32 %v33, 4294901760
    %924 = vmatpush1.msra.mxu0 %v923
    %925 = vmatprep.subr.mxu0 0.0
    %v926 = vand.u32 %v34, 4294901760
    %927 = vmatpush1.msra.mxu0 %v926
    %928 = vmatprep.subr.mxu0 0.0
    %v929 = vand.u32 %v35, 4294901760
    %930 = vmatpush1.msra.mxu0 %v929
    %931 = vmatprep.subr.mxu0 0.0
    %v932 = vand.u32 %v36, 4294901760
    %933 = vmatpush1.msra.mxu0 %v932
    %934 = vmatprep.subr.mxu0 0.0
    %v935 = vand.u32 %v37, 4294901760
    %936 = vmatpush1.msra.mxu0 %v935
    %937 = vmatprep.subr.mxu0 0.0
    %v938 = vand.u32 %v38, 4294901760
    %939 = vmatpush1.msra.mxu0 %v938
    %940 = vmatprep.subr.mxu0 0.0
    %v941 = vand.u32 %v39, 4294901760
    %942 = vmatpush1.msra.mxu0 %v941
    %943 = vmatprep.subr.mxu0 0.0
    %v944 = vand.u32 %v40, 4294901760
    %945 = vmatpush1.msra.mxu0 %v944
    %946 = vmatprep.subr.mxu0 0.0
    %v947 = vand.u32 %v41, 4294901760
    %948 = vmatpush1.msra.mxu0 %v947
    %949 = vmatprep.subr.mxu0 0.0
    %v950 = vand.u32 %v42, 4294901760
    %951 = vmatpush1.msra.mxu0 %v950
    %952 = vmatprep.subr.mxu0 0.0
    %v953 = vand.u32 %v43, 4294901760
    %954 = vmatpush1.msra.mxu0 %v953
    %955 = vmatprep.subr.mxu0 0.0
    %v956 = vand.u32 %v44, 4294901760
    %957 = vmatpush1.msra.mxu0 %v956
    %958 = vmatprep.subr.mxu0 0.0
    %v959 = vand.u32 %v45, 4294901760
    %960 = vmatpush1.msra.mxu0 %v959
    %961 = vmatprep.subr.mxu0 0.0
    %v962 = vand.u32 %v46, 4294901760
    %963 = vmatpush1.msra.mxu0 %v962
    %964 = vmatprep.subr.mxu0 0.0
    %v965 = vand.u32 %v47, 4294901760
    %966 = vmatpush1.msra.mxu0 %v965
    %967 = vmatprep.subr.mxu0 0.0
    %v968 = vand.u32 %v48, 4294901760
    %969 = vmatpush1.msra.mxu0 %v968
    %970 = vmatprep.subr.mxu0 0.0
    %v971 = vand.u32 %v49, 4294901760
    %972 = vmatpush1.msra.mxu0 %v971
    %973 = vmatprep.subr.mxu0 0.0
    %v974 = vand.u32 %v50, 4294901760
    %975 = vmatpush1.msra.mxu0 %v974
    %v976 = vand.u32 %v113, 4294901760
    %977 = vmatprep.mubr.f32.mxu0 %v976
    %v978 = vand.u32 %v112, 4294901760
    %979 = vmatmul.mubr.f32.gmra.mrb[0].mxu0 %v978
    %v980 = vpop.f32.mrb[0].mxu0
    %v981 = vadd.f32 %v877, %v980
    %v982 = vpop.f32.mrb[0].mxu0
    %983 = vdwg.mxu0
    %984 = vmatprep.subr.mxu0 0.0
    %v985 = vand.u32 %v51, 4294901760
    %986 = vmatpush1.msra.mxu0 %v985
    %987 = vmatprep.subr.mxu0 0.0
    %v988 = vand.u32 %v52, 4294901760
    %989 = vmatpush1.msra.mxu0 %v988
    %990 = vmatprep.subr.mxu0 0.0
    %v991 = vand.u32 %v53, 4294901760
    %992 = vmatpush1.msra.mxu0 %v991
    %993 = vmatprep.subr.mxu0 0.0
    %v994 = vand.u32 %v54, 4294901760
    %995 = vmatpush1.msra.mxu0 %v994
    %996 = vmatprep.subr.mxu0 0.0
    %v997 = vand.u32 %v55, 4294901760
    %998 = vmatpush1.msra.mxu0 %v997
    %999 = vmatprep.subr.mxu0 0.0
    %v1000 = vand.u32 %v56, 4294901760
    %1001 = vmatpush1.msra.mxu0 %v1000
    %1002 = vmatprep.subr.mxu0 0.0
    %v1003 = vand.u32 %v57, 4294901760
    %1004 = vmatpush1.msra.mxu0 %v1003
    %1005 = vmatprep.subr.mxu0 0.0
    %v1006 = vand.u32 %v58, 4294901760
    %1007 = vmatpush1.msra.mxu0 %v1006
    %1008 = vmatprep.subr.mxu0 0.0
    %v1009 = vand.u32 %v59, 4294901760
    %1010 = vmatpush1.msra.mxu0 %v1009
    %1011 = vmatprep.subr.mxu0 0.0
    %v1012 = vand.u32 %v60, 4294901760
    %1013 = vmatpush1.msra.mxu0 %v1012
    %1014 = vmatprep.subr.mxu0 0.0
    %v1015 = vand.u32 %v61, 4294901760
    %1016 = vmatpush1.msra.mxu0 %v1015
    %1017 = vmatprep.subr.mxu0 0.0
    %v1018 = vand.u32 %v62, 4294901760
    %1019 = vmatpush1.msra.mxu0 %v1018
    %1020 = vmatprep.subr.mxu0 0.0
    %v1021 = vand.u32 %v63, 4294901760
    %1022 = vmatpush1.msra.mxu0 %v1021
    %1023 = vmatprep.subr.mxu0 0.0
    %v1024 = vand.u32 %v64, 4294901760
    %1025 = vmatpush1.msra.mxu0 %v1024
    %1026 = vmatprep.subr.mxu0 0.0
    %v1027 = vand.u32 %v65, 4294901760
    %1028 = vmatpush1.msra.mxu0 %v1027
    %1029 = vmatprep.subr.mxu0 0.0
    %v1030 = vand.u32 %v66, 4294901760
    %1031 = vmatpush1.msra.mxu0 %v1030
    %1032 = vmatprep.subr.mxu0 0.0
    %v1033 = vand.u32 %v67, 4294901760
    %1034 = vmatpush1.msra.mxu0 %v1033
    %1035 = vmatprep.subr.mxu0 0.0
    %v1036 = vand.u32 %v68, 4294901760
    %1037 = vmatpush1.msra.mxu0 %v1036
    %1038 = vmatprep.subr.mxu0 0.0
    %1039 = vmatpush1.msra.mxu0 0.0
    %1040 = vmatprep.subr.mxu0 0.0
    %1041 = vmatpush1.msra.mxu0 0.0
    %1042 = vmatprep.subr.mxu0 0.0
    %1043 = vmatpush1.msra.mxu0 0.0
    %1044 = vmatprep.subr.mxu0 0.0
    %1045 = vmatpush1.msra.mxu0 0.0
    %1046 = vmatprep.subr.mxu0 0.0
    %1047 = vmatpush1.msra.mxu0 0.0
    %1048 = vmatprep.subr.mxu0 0.0
    %1049 = vmatpush1.msra.mxu0 0.0
    %1050 = vmatprep.subr.mxu0 0.0
    %1051 = vmatpush1.msra.mxu0 0.0
    %1052 = vmatprep.subr.mxu0 0.0
    %1053 = vmatpush1.msra.mxu0 0.0
    %1054 = vmatprep.subr.mxu0 0.0
    %1055 = vmatpush1.msra.mxu0 0.0
    %1056 = vmatprep.subr.mxu0 0.0
    %1057 = vmatpush1.msra.mxu0 0.0
    %1058 = vmatprep.subr.mxu0 0.0
    %1059 = vmatpush1.msra.mxu0 0.0
    %1060 = vmatprep.subr.mxu0 0.0
    %1061 = vmatpush1.msra.mxu0 0.0
    %1062 = vmatprep.subr.mxu0 0.0
    %1063 = vmatpush1.msra.mxu0 0.0
    %1064 = vmatprep.subr.mxu0 0.0
    %1065 = vmatpush1.msra.mxu0 0.0
    %v1066 = vand.u32 %v120, 4294901760
    %v1067 = vsub.f32 %v120, %v1066
    %v1068 = vand.u32 %v1067, 4294901760
    %v1069 = vsub.f32 %v1067, %v1068
    %v1070 = vand.u32 %v1069, 4294901760
    %1071 = vmatprep.mubr.f32.mxu0 %v1070
    %v1072 = vand.u32 %v114, 4294901760
    %v1073 = vsub.f32 %v114, %v1072
    %v1074 = vand.u32 %v1073, 4294901760
    %v1075 = vsub.f32 %v1073, %v1074
    %v1076 = vand.u32 %v1075, 4294901760
    %1077 = vmatmul.mubr.f32.gmra.mrb[0].mxu0 %v1076
    %v1078 = vpop.f32.mrb[0].mxu0
    %v1079 = vadd.f32 %v981, %v1078
    %v1080 = vpop.f32.mrb[0].mxu0
    %1081 = vdwg.mxu0
    %1082 = vmatprep.subr.mxu0 0.0
    %v1083 = vand.u32 %v51, 4294901760
    %v1084 = vsub.f32 %v51, %v1083
    %v1085 = vand.u32 %v1084, 4294901760
    %v1086 = vsub.f32 %v1084, %v1085
    %v1087 = vand.u32 %v1086, 4294901760
    %1088 = vmatpush1.msra.mxu0 %v1087
    %1089 = vmatprep.subr.mxu0 0.0
    %v1090 = vand.u32 %v52, 4294901760
    %v1091 = vsub.f32 %v52, %v1090
    %v1092 = vand.u32 %v1091, 4294901760
    %v1093 = vsub.f32 %v1091, %v1092
    %v1094 = vand.u32 %v1093, 4294901760
    %1095 = vmatpush1.msra.mxu0 %v1094
    %1096 = vmatprep.subr.mxu0 0.0
    %v1097 = vand.u32 %v53, 4294901760
    %v1098 = vsub.f32 %v53, %v1097
    %v1099 = vand.u32 %v1098, 4294901760
    %v1100 = vsub.f32 %v1098, %v1099
    %v1101 = vand.u32 %v1100, 4294901760
    %1102 = vmatpush1.msra.mxu0 %v1101
    %1103 = vmatprep.subr.mxu0 0.0
    %v1104 = vand.u32 %v54, 4294901760
    %v1105 = vsub.f32 %v54, %v1104
    %v1106 = vand.u32 %v1105, 4294901760
    %v1107 = vsub.f32 %v1105, %v1106
    %v1108 = vand.u32 %v1107, 4294901760
    %1109 = vmatpush1.msra.mxu0 %v1108
    %1110 = vmatprep.subr.mxu0 0.0
    %v1111 = vand.u32 %v55, 4294901760
    %v1112 = vsub.f32 %v55, %v1111
    %v1113 = vand.u32 %v1112, 4294901760
    %v1114 = vsub.f32 %v1112, %v1113
    %v1115 = vand.u32 %v1114, 4294901760
    %1116 = vmatpush1.msra.mxu0 %v1115
    %1117 = vmatprep.subr.mxu0 0.0
    %v1118 = vand.u32 %v56, 4294901760
    %v1119 = vsub.f32 %v56, %v1118
    %v1120 = vand.u32 %v1119, 4294901760
    %v1121 = vsub.f32 %v1119, %v1120
    %v1122 = vand.u32 %v1121, 4294901760
    %1123 = vmatpush1.msra.mxu0 %v1122
    %1124 = vmatprep.subr.mxu0 0.0
    %v1125 = vand.u32 %v57, 4294901760
    %v1126 = vsub.f32 %v57, %v1125
    %v1127 = vand.u32 %v1126, 4294901760
    %v1128 = vsub.f32 %v1126, %v1127
    %v1129 = vand.u32 %v1128, 4294901760
    %1130 = vmatpush1.msra.mxu0 %v1129
    %1131 = vmatprep.subr.mxu0 0.0
    %v1132 = vand.u32 %v58, 4294901760
    %v1133 = vsub.f32 %v58, %v1132
    %v1134 = vand.u32 %v1133, 4294901760
    %v1135 = vsub.f32 %v1133, %v1134
    %v1136 = vand.u32 %v1135, 4294901760
    %1137 = vmatpush1.msra.mxu0 %v1136
    %1138 = vmatprep.subr.mxu0 0.0
    %v1139 = vand.u32 %v59, 4294901760
    %v1140 = vsub.f32 %v59, %v1139
    %v1141 = vand.u32 %v1140, 4294901760
    %v1142 = vsub.f32 %v1140, %v1141
    %v1143 = vand.u32 %v1142, 4294901760
    %1144 = vmatpush1.msra.mxu0 %v1143
    %1145 = vmatprep.subr.mxu0 0.0
    %v1146 = vand.u32 %v60, 4294901760
    %v1147 = vsub.f32 %v60, %v1146
    %v1148 = vand.u32 %v1147, 4294901760
    %v1149 = vsub.f32 %v1147, %v1148
    %v1150 = vand.u32 %v1149, 4294901760
    %1151 = vmatpush1.msra.mxu0 %v1150
    %1152 = vmatprep.subr.mxu0 0.0
    %v1153 = vand.u32 %v61, 4294901760
    %v1154 = vsub.f32 %v61, %v1153
    %v1155 = vand.u32 %v1154, 4294901760
    %v1156 = vsub.f32 %v1154, %v1155
    %v1157 = vand.u32 %v1156, 4294901760
    %1158 = vmatpush1.msra.mxu0 %v1157
    %1159 = vmatprep.subr.mxu0 0.0
    %v1160 = vand.u32 %v62, 4294901760
    %v1161 = vsub.f32 %v62, %v1160
    %v1162 = vand.u32 %v1161, 4294901760
    %v1163 = vsub.f32 %v1161, %v1162
    %v1164 = vand.u32 %v1163, 4294901760
    %1165 = vmatpush1.msra.mxu0 %v1164
    %1166 = vmatprep.subr.mxu0 0.0
    %v1167 = vand.u32 %v63, 4294901760
    %v1168 = vsub.f32 %v63, %v1167
    %v1169 = vand.u32 %v1168, 4294901760
    %v1170 = vsub.f32 %v1168, %v1169
    %v1171 = vand.u32 %v1170, 4294901760
    %1172 = vmatpush1.msra.mxu0 %v1171
    %1173 = vmatprep.subr.mxu0 0.0
    %v1174 = vand.u32 %v64, 4294901760
    %v1175 = vsub.f32 %v64, %v1174
    %v1176 = vand.u32 %v1175, 4294901760
    %v1177 = vsub.f32 %v1175, %v1176
    %v1178 = vand.u32 %v1177, 4294901760
    %1179 = vmatpush1.msra.mxu0 %v1178
    %1180 = vmatprep.subr.mxu0 0.0
    %v1181 = vand.u32 %v65, 4294901760
    %v1182 = vsub.f32 %v65, %v1181
    %v1183 = vand.u32 %v1182, 4294901760
    %v1184 = vsub.f32 %v1182, %v1183
    %v1185 = vand.u32 %v1184, 4294901760
    %1186 = vmatpush1.msra.mxu0 %v1185
    %1187 = vmatprep.subr.mxu0 0.0
    %v1188 = vand.u32 %v66, 4294901760
    %v1189 = vsub.f32 %v66, %v1188
    %v1190 = vand.u32 %v1189, 4294901760
    %v1191 = vsub.f32 %v1189, %v1190
    %v1192 = vand.u32 %v1191, 4294901760
    %1193 = vmatpush1.msra.mxu0 %v1192
    %1194 = vmatprep.subr.mxu0 0.0
    %v1195 = vand.u32 %v67, 4294901760
    %v1196 = vsub.f32 %v67, %v1195
    %v1197 = vand.u32 %v1196, 4294901760
    %v1198 = vsub.f32 %v1196, %v1197
    %v1199 = vand.u32 %v1198, 4294901760
    %1200 = vmatpush1.msra.mxu0 %v1199
    %1201 = vmatprep.subr.mxu0 0.0
    %v1202 = vand.u32 %v68, 4294901760
    %v1203 = vsub.f32 %v68, %v1202
    %v1204 = vand.u32 %v1203, 4294901760
    %v1205 = vsub.f32 %v1203, %v1204
    %v1206 = vand.u32 %v1205, 4294901760
    %1207 = vmatpush1.msra.mxu0 %v1206
    %1208 = vmatprep.subr.mxu0 0.0
    %1209 = vmatpush1.msra.mxu0 0.0
    %1210 = vmatprep.subr.mxu0 0.0
    %1211 = vmatpush1.msra.mxu0 0.0
    %1212 = vmatprep.subr.mxu0 0.0
    %1213 = vmatpush1.msra.mxu0 0.0
    %1214 = vmatprep.subr.mxu0 0.0
    %1215 = vmatpush1.msra.mxu0 0.0
    %1216 = vmatprep.subr.mxu0 0.0
    %1217 = vmatpush1.msra.mxu0 0.0
    %1218 = vmatprep.subr.mxu0 0.0
    %1219 = vmatpush1.msra.mxu0 0.0
    %1220 = vmatprep.subr.mxu0 0.0
    %1221 = vmatpush1.msra.mxu0 0.0
    %1222 = vmatprep.subr.mxu0 0.0
    %1223 = vmatpush1.msra.mxu0 0.0
    %1224 = vmatprep.subr.mxu0 0.0
    %1225 = vmatpush1.msra.mxu0 0.0
    %1226 = vmatprep.subr.mxu0 0.0
    %1227 = vmatpush1.msra.mxu0 0.0
    %1228 = vmatprep.subr.mxu0 0.0
    %1229 = vmatpush1.msra.mxu0 0.0
    %1230 = vmatprep.subr.mxu0 0.0
    %1231 = vmatpush1.msra.mxu0 0.0
    %1232 = vmatprep.subr.mxu0 0.0
    %1233 = vmatpush1.msra.mxu0 0.0
    %1234 = vmatprep.subr.mxu0 0.0
    %1235 = vmatpush1.msra.mxu0 0.0
    %v1236 = vand.u32 %v120, 4294901760
    %1237 = vmatprep.mubr.f32.mxu0 %v1236
    %v1238 = vand.u32 %v114, 4294901760
    %1239 = vmatmul.mubr.f32.gmra.mrb[0].mxu0 %v1238
    %v1240 = vpop.f32.mrb[0].mxu0
    %v1241 = vadd.f32 %v1079, %v1240
    %v1242 = vpop.f32.mrb[0].mxu0
    %1243 = vdwg.mxu0
    %1244 = vmatprep.subr.mxu0 0.0
    %v1245 = vand.u32 %v51, 4294901760
    %v1246 = vsub.f32 %v51, %v1245
    %1247 = vmatpush1.msra.mxu0 %v1246
    %1248 = vmatprep.subr.mxu0 0.0
    %v1249 = vand.u32 %v52, 4294901760
    %v1250 = vsub.f32 %v52, %v1249
    %1251 = vmatpush1.msra.mxu0 %v1250
    %1252 = vmatprep.subr.mxu0 0.0
    %v1253 = vand.u32 %v53, 4294901760
    %v1254 = vsub.f32 %v53, %v1253
    %1255 = vmatpush1.msra.mxu0 %v1254
    %1256 = vmatprep.subr.mxu0 0.0
    %v1257 = vand.u32 %v54, 4294901760
    %v1258 = vsub.f32 %v54, %v1257
    %1259 = vmatpush1.msra.mxu0 %v1258
    %1260 = vmatprep.subr.mxu0 0.0
    %v1261 = vand.u32 %v55, 4294901760
    %v1262 = vsub.f32 %v55, %v1261
    %1263 = vmatpush1.msra.mxu0 %v1262
    %1264 = vmatprep.subr.mxu0 0.0
    %v1265 = vand.u32 %v56, 4294901760
    %v1266 = vsub.f32 %v56, %v1265
    %1267 = vmatpush1.msra.mxu0 %v1266
    %1268 = vmatprep.subr.mxu0 0.0
    %v1269 = vand.u32 %v57, 4294901760
    %v1270 = vsub.f32 %v57, %v1269
    %1271 = vmatpush1.msra.mxu0 %v1270
    %1272 = vmatprep.subr.mxu0 0.0
    %v1273 = vand.u32 %v58, 4294901760
    %v1274 = vsub.f32 %v58, %v1273
    %1275 = vmatpush1.msra.mxu0 %v1274
    %1276 = vmatprep.subr.mxu0 0.0
    %v1277 = vand.u32 %v59, 4294901760
    %v1278 = vsub.f32 %v59, %v1277
    %1279 = vmatpush1.msra.mxu0 %v1278
    %1280 = vmatprep.subr.mxu0 0.0
    %v1281 = vand.u32 %v60, 4294901760
    %v1282 = vsub.f32 %v60, %v1281
    %1283 = vmatpush1.msra.mxu0 %v1282
    %1284 = vmatprep.subr.mxu0 0.0
    %v1285 = vand.u32 %v61, 4294901760
    %v1286 = vsub.f32 %v61, %v1285
    %1287 = vmatpush1.msra.mxu0 %v1286
    %1288 = vmatprep.subr.mxu0 0.0
    %v1289 = vand.u32 %v62, 4294901760
    %v1290 = vsub.f32 %v62, %v1289
    %1291 = vmatpush1.msra.mxu0 %v1290
    %1292 = vmatprep.subr.mxu0 0.0
    %v1293 = vand.u32 %v63, 4294901760
    %v1294 = vsub.f32 %v63, %v1293
    %1295 = vmatpush1.msra.mxu0 %v1294
    %1296 = vmatprep.subr.mxu0 0.0
    %v1297 = vand.u32 %v64, 4294901760
    %v1298 = vsub.f32 %v64, %v1297
    %1299 = vmatpush1.msra.mxu0 %v1298
    %1300 = vmatprep.subr.mxu0 0.0
    %v1301 = vand.u32 %v65, 4294901760
    %v1302 = vsub.f32 %v65, %v1301
    %1303 = vmatpush1.msra.mxu0 %v1302
    %1304 = vmatprep.subr.mxu0 0.0
    %v1305 = vand.u32 %v66, 4294901760
    %v1306 = vsub.f32 %v66, %v1305
    %1307 = vmatpush1.msra.mxu0 %v1306
    %1308 = vmatprep.subr.mxu0 0.0
    %v1309 = vand.u32 %v67, 4294901760
    %v1310 = vsub.f32 %v67, %v1309
    %1311 = vmatpush1.msra.mxu0 %v1310
    %1312 = vmatprep.subr.mxu0 0.0
    %v1313 = vand.u32 %v68, 4294901760
    %v1314 = vsub.f32 %v68, %v1313
    %1315 = vmatpush1.msra.mxu0 %v1314
    %1316 = vmatprep.subr.mxu0 0.0
    %1317 = vmatpush1.msra.mxu0 0.0
    %1318 = vmatprep.subr.mxu0 0.0
    %1319 = vmatpush1.msra.mxu0 0.0
    %1320 = vmatprep.subr.mxu0 0.0
    %1321 = vmatpush1.msra.mxu0 0.0
    %1322 = vmatprep.subr.mxu0 0.0
    %1323 = vmatpush1.msra.mxu0 0.0
    %1324 = vmatprep.subr.mxu0 0.0
    %1325 = vmatpush1.msra.mxu0 0.0
    %1326 = vmatprep.subr.mxu0 0.0
    %1327 = vmatpush1.msra.mxu0 0.0
    %1328 = vmatprep.subr.mxu0 0.0
    %1329 = vmatpush1.msra.mxu0 0.0
    %1330 = vmatprep.subr.mxu0 0.0
    %1331 = vmatpush1.msra.mxu0 0.0
    %1332 = vmatprep.subr.mxu0 0.0
    %1333 = vmatpush1.msra.mxu0 0.0
    %1334 = vmatprep.subr.mxu0 0.0
    %1335 = vmatpush1.msra.mxu0 0.0
    %1336 = vmatprep.subr.mxu0 0.0
    %1337 = vmatpush1.msra.mxu0 0.0
    %1338 = vmatprep.subr.mxu0 0.0
    %1339 = vmatpush1.msra.mxu0 0.0
    %1340 = vmatprep.subr.mxu0 0.0
    %1341 = vmatpush1.msra.mxu0 0.0
    %1342 = vmatprep.subr.mxu0 0.0
    %1343 = vmatpush1.msra.mxu0 0.0
    %v1344 = vand.u32 %v120, 4294901760
    %v1345 = vsub.f32 %v120, %v1344
    %1346 = vmatprep.mubr.f32.mxu0 %v1345
    %v1347 = vand.u32 %v114, 4294901760
    %v1348 = vsub.f32 %v114, %v1347
    %1349 = vmatmul.mubr.f32.gmra.mrb[0].mxu0 %v1348
    %v1350 = vpop.f32.mrb[0].mxu0
    %v1351 = vadd.f32 %v1241, %v1350
    %v1352 = vpop.f32.mrb[0].mxu0
    %1353 = vdwg.mxu0
    %1354 = vmatprep.subr.mxu0 0.0
    %v1355 = vand.u32 %v51, 4294901760
    %1356 = vmatpush1.msra.mxu0 %v1355
    %1357 = vmatprep.subr.mxu0 0.0
    %v1358 = vand.u32 %v52, 4294901760
    %1359 = vmatpush1.msra.mxu0 %v1358
    %1360 = vmatprep.subr.mxu0 0.0
    %v1361 = vand.u32 %v53, 4294901760
    %1362 = vmatpush1.msra.mxu0 %v1361
    %1363 = vmatprep.subr.mxu0 0.0
    %v1364 = vand.u32 %v54, 4294901760
    %1365 = vmatpush1.msra.mxu0 %v1364
    %1366 = vmatprep.subr.mxu0 0.0
    %v1367 = vand.u32 %v55, 4294901760
    %1368 = vmatpush1.msra.mxu0 %v1367
    %1369 = vmatprep.subr.mxu0 0.0
    %v1370 = vand.u32 %v56, 4294901760
    %1371 = vmatpush1.msra.mxu0 %v1370
    %1372 = vmatprep.subr.mxu0 0.0
    %v1373 = vand.u32 %v57, 4294901760
    %1374 = vmatpush1.msra.mxu0 %v1373
    %1375 = vmatprep.subr.mxu0 0.0
    %v1376 = vand.u32 %v58, 4294901760
    %1377 = vmatpush1.msra.mxu0 %v1376
    %1378 = vmatprep.subr.mxu0 0.0
    %v1379 = vand.u32 %v59, 4294901760
    %1380 = vmatpush1.msra.mxu0 %v1379
    %1381 = vmatprep.subr.mxu0 0.0
    %v1382 = vand.u32 %v60, 4294901760
    %1383 = vmatpush1.msra.mxu0 %v1382
    %1384 = vmatprep.subr.mxu0 0.0
    %v1385 = vand.u32 %v61, 4294901760
    %1386 = vmatpush1.msra.mxu0 %v1385
    %1387 = vmatprep.subr.mxu0 0.0
    %v1388 = vand.u32 %v62, 4294901760
    %1389 = vmatpush1.msra.mxu0 %v1388
    %1390 = vmatprep.subr.mxu0 0.0
    %v1391 = vand.u32 %v63, 4294901760
    %1392 = vmatpush1.msra.mxu0 %v1391
    %1393 = vmatprep.subr.mxu0 0.0
    %v1394 = vand.u32 %v64, 4294901760
    %1395 = vmatpush1.msra.mxu0 %v1394
    %1396 = vmatprep.subr.mxu0 0.0
    %v1397 = vand.u32 %v65, 4294901760
    %1398 = vmatpush1.msra.mxu0 %v1397
    %1399 = vmatprep.subr.mxu0 0.0
    %v1400 = vand.u32 %v66, 4294901760
    %1401 = vmatpush1.msra.mxu0 %v1400
    %1402 = vmatprep.subr.mxu0 0.0
    %v1403 = vand.u32 %v67, 4294901760
    %1404 = vmatpush1.msra.mxu0 %v1403
    %1405 = vmatprep.subr.mxu0 0.0
    %v1406 = vand.u32 %v68, 4294901760
    %1407 = vmatpush1.msra.mxu0 %v1406
    %1408 = vmatprep.subr.mxu0 0.0
    %1409 = vmatpush1.msra.mxu0 0.0
    %1410 = vmatprep.subr.mxu0 0.0
    %1411 = vmatpush1.msra.mxu0 0.0
    %1412 = vmatprep.subr.mxu0 0.0
    %1413 = vmatpush1.msra.mxu0 0.0
    %1414 = vmatprep.subr.mxu0 0.0
    %1415 = vmatpush1.msra.mxu0 0.0
    %1416 = vmatprep.subr.mxu0 0.0
    %1417 = vmatpush1.msra.mxu0 0.0
    %1418 = vmatprep.subr.mxu0 0.0
    %1419 = vmatpush1.msra.mxu0 0.0
    %1420 = vmatprep.subr.mxu0 0.0
    %1421 = vmatpush1.msra.mxu0 0.0
    %1422 = vmatprep.subr.mxu0 0.0
    %1423 = vmatpush1.msra.mxu0 0.0
    %1424 = vmatprep.subr.mxu0 0.0
    %1425 = vmatpush1.msra.mxu0 0.0
    %1426 = vmatprep.subr.mxu0 0.0
    %1427 = vmatpush1.msra.mxu0 0.0
    %1428 = vmatprep.subr.mxu0 0.0
    %1429 = vmatpush1.msra.mxu0 0.0
    %1430 = vmatprep.subr.mxu0 0.0
    %1431 = vmatpush1.msra.mxu0 0.0
    %1432 = vmatprep.subr.mxu0 0.0
    %1433 = vmatpush1.msra.mxu0 0.0
    %1434 = vmatprep.subr.mxu0 0.0
    %1435 = vmatpush1.msra.mxu0 0.0
    %v1436 = vand.u32 %v120, 4294901760
    %v1437 = vsub.f32 %v120, %v1436
    %v1438 = vand.u32 %v1437, 4294901760
    %1439 = vmatprep.mubr.f32.mxu0 %v1438
    %v1440 = vand.u32 %v114, 4294901760
    %v1441 = vsub.f32 %v114, %v1440
    %v1442 = vand.u32 %v1441, 4294901760
    %1443 = vmatmul.mubr.f32.gmra.mrb[0].mxu0 %v1442
    %v1444 = vpop.f32.mrb[0].mxu0
    %v1445 = vadd.f32 %v1351, %v1444
    %v1446 = vpop.f32.mrb[0].mxu0
    %1447 = vdwg.mxu0
    %1448 = vmatprep.subr.mxu0 0.0
    %v1449 = vand.u32 %v51, 4294901760
    %v1450 = vsub.f32 %v51, %v1449
    %v1451 = vand.u32 %v1450, 4294901760
    %1452 = vmatpush1.msra.mxu0 %v1451
    %1453 = vmatprep.subr.mxu0 0.0
    %v1454 = vand.u32 %v52, 4294901760
    %v1455 = vsub.f32 %v52, %v1454
    %v1456 = vand.u32 %v1455, 4294901760
    %1457 = vmatpush1.msra.mxu0 %v1456
    %1458 = vmatprep.subr.mxu0 0.0
    %v1459 = vand.u32 %v53, 4294901760
    %v1460 = vsub.f32 %v53, %v1459
    %v1461 = vand.u32 %v1460, 4294901760
    %1462 = vmatpush1.msra.mxu0 %v1461
    %1463 = vmatprep.subr.mxu0 0.0
    %v1464 = vand.u32 %v54, 4294901760
    %v1465 = vsub.f32 %v54, %v1464
    %v1466 = vand.u32 %v1465, 4294901760
    %1467 = vmatpush1.msra.mxu0 %v1466
    %1468 = vmatprep.subr.mxu0 0.0
    %v1469 = vand.u32 %v55, 4294901760
    %v1470 = vsub.f32 %v55, %v1469
    %v1471 = vand.u32 %v1470, 4294901760
    %1472 = vmatpush1.msra.mxu0 %v1471
    %1473 = vmatprep.subr.mxu0 0.0
    %v1474 = vand.u32 %v56, 4294901760
    %v1475 = vsub.f32 %v56, %v1474
    %v1476 = vand.u32 %v1475, 4294901760
    %1477 = vmatpush1.msra.mxu0 %v1476
    %1478 = vmatprep.subr.mxu0 0.0
    %v1479 = vand.u32 %v57, 4294901760
    %v1480 = vsub.f32 %v57, %v1479
    %v1481 = vand.u32 %v1480, 4294901760
    %1482 = vmatpush1.msra.mxu0 %v1481
    %1483 = vmatprep.subr.mxu0 0.0
    %v1484 = vand.u32 %v58, 4294901760
    %v1485 = vsub.f32 %v58, %v1484
    %v1486 = vand.u32 %v1485, 4294901760
    %1487 = vmatpush1.msra.mxu0 %v1486
    %1488 = vmatprep.subr.mxu0 0.0
    %v1489 = vand.u32 %v59, 4294901760
    %v1490 = vsub.f32 %v59, %v1489
    %v1491 = vand.u32 %v1490, 4294901760
    %1492 = vmatpush1.msra.mxu0 %v1491
    %1493 = vmatprep.subr.mxu0 0.0
    %v1494 = vand.u32 %v60, 4294901760
    %v1495 = vsub.f32 %v60, %v1494
    %v1496 = vand.u32 %v1495, 4294901760
    %1497 = vmatpush1.msra.mxu0 %v1496
    %1498 = vmatprep.subr.mxu0 0.0
    %v1499 = vand.u32 %v61, 4294901760
    %v1500 = vsub.f32 %v61, %v1499
    %v1501 = vand.u32 %v1500, 4294901760
    %1502 = vmatpush1.msra.mxu0 %v1501
    %1503 = vmatprep.subr.mxu0 0.0
    %v1504 = vand.u32 %v62, 4294901760
    %v1505 = vsub.f32 %v62, %v1504
    %v1506 = vand.u32 %v1505, 4294901760
    %1507 = vmatpush1.msra.mxu0 %v1506
    %1508 = vmatprep.subr.mxu0 0.0
    %v1509 = vand.u32 %v63, 4294901760
    %v1510 = vsub.f32 %v63, %v1509
    %v1511 = vand.u32 %v1510, 4294901760
    %1512 = vmatpush1.msra.mxu0 %v1511
    %1513 = vmatprep.subr.mxu0 0.0
    %v1514 = vand.u32 %v64, 4294901760
    %v1515 = vsub.f32 %v64, %v1514
    %v1516 = vand.u32 %v1515, 4294901760
    %1517 = vmatpush1.msra.mxu0 %v1516
    %1518 = vmatprep.subr.mxu0 0.0
    %v1519 = vand.u32 %v65, 4294901760
    %v1520 = vsub.f32 %v65, %v1519
    %v1521 = vand.u32 %v1520, 4294901760
    %1522 = vmatpush1.msra.mxu0 %v1521
    %1523 = vmatprep.subr.mxu0 0.0
    %v1524 = vand.u32 %v66, 4294901760
    %v1525 = vsub.f32 %v66, %v1524
    %v1526 = vand.u32 %v1525, 4294901760
    %1527 = vmatpush1.msra.mxu0 %v1526
    %1528 = vmatprep.subr.mxu0 0.0
    %v1529 = vand.u32 %v67, 4294901760
    %v1530 = vsub.f32 %v67, %v1529
    %v1531 = vand.u32 %v1530, 4294901760
    %1532 = vmatpush1.msra.mxu0 %v1531
    %1533 = vmatprep.subr.mxu0 0.0
    %v1534 = vand.u32 %v68, 4294901760
    %v1535 = vsub.f32 %v68, %v1534
    %v1536 = vand.u32 %v1535, 4294901760
    %1537 = vmatpush1.msra.mxu0 %v1536
    %1538 = vmatprep.subr.mxu0 0.0
    %1539 = vmatpush1.msra.mxu0 0.0
    %1540 = vmatprep.subr.mxu0 0.0
    %1541 = vmatpush1.msra.mxu0 0.0
    %1542 = vmatprep.subr.mxu0 0.0
    %1543 = vmatpush1.msra.mxu0 0.0
    %1544 = vmatprep.subr.mxu0 0.0
    %1545 = vmatpush1.msra.mxu0 0.0
    %1546 = vmatprep.subr.mxu0 0.0
    %1547 = vmatpush1.msra.mxu0 0.0
    %1548 = vmatprep.subr.mxu0 0.0
    %1549 = vmatpush1.msra.mxu0 0.0
    %1550 = vmatprep.subr.mxu0 0.0
    %1551 = vmatpush1.msra.mxu0 0.0
    %1552 = vmatprep.subr.mxu0 0.0
    %1553 = vmatpush1.msra.mxu0 0.0
    %1554 = vmatprep.subr.mxu0 0.0
    %1555 = vmatpush1.msra.mxu0 0.0
    %1556 = vmatprep.subr.mxu0 0.0
    %1557 = vmatpush1.msra.mxu0 0.0
    %1558 = vmatprep.subr.mxu0 0.0
    %1559 = vmatpush1.msra.mxu0 0.0
    %1560 = vmatprep.subr.mxu0 0.0
    %1561 = vmatpush1.msra.mxu0 0.0
    %1562 = vmatprep.subr.mxu0 0.0
    %1563 = vmatpush1.msra.mxu0 0.0
    %1564 = vmatprep.subr.mxu0 0.0
    %1565 = vmatpush1.msra.mxu0 0.0
    %v1566 = vand.u32 %v120, 4294901760
    %1567 = vmatprep.mubr.f32.mxu0 %v1566
    %v1568 = vand.u32 %v114, 4294901760
    %1569 = vmatmul.mubr.f32.gmra.mrb[0].mxu0 %v1568
    %v1570 = vpop.f32.mrb[0].mxu0
    %v1571 = vadd.f32 %v1445, %v1570
    %v1572 = vpop.f32.mrb[0].mxu0
    %1573 = vdwg.mxu0
    %1574 = vmatprep.subr.mxu0 0.0
    %v1575 = vand.u32 %v51, 4294901760
    %1576 = vmatpush1.msra.mxu0 %v1575
    %1577 = vmatprep.subr.mxu0 0.0
    %v1578 = vand.u32 %v52, 4294901760
    %1579 = vmatpush1.msra.mxu0 %v1578
    %1580 = vmatprep.subr.mxu0 0.0
    %v1581 = vand.u32 %v53, 4294901760
    %1582 = vmatpush1.msra.mxu0 %v1581
    %1583 = vmatprep.subr.mxu0 0.0
    %v1584 = vand.u32 %v54, 4294901760
    %1585 = vmatpush1.msra.mxu0 %v1584
    %1586 = vmatprep.subr.mxu0 0.0
    %v1587 = vand.u32 %v55, 4294901760
    %1588 = vmatpush1.msra.mxu0 %v1587
    %1589 = vmatprep.subr.mxu0 0.0
    %v1590 = vand.u32 %v56, 4294901760
    %1591 = vmatpush1.msra.mxu0 %v1590
    %1592 = vmatprep.subr.mxu0 0.0
    %v1593 = vand.u32 %v57, 4294901760
    %1594 = vmatpush1.msra.mxu0 %v1593
    %1595 = vmatprep.subr.mxu0 0.0
    %v1596 = vand.u32 %v58, 4294901760
    %1597 = vmatpush1.msra.mxu0 %v1596
    %1598 = vmatprep.subr.mxu0 0.0
    %v1599 = vand.u32 %v59, 4294901760
    %1600 = vmatpush1.msra.mxu0 %v1599
    %1601 = vmatprep.subr.mxu0 0.0
    %v1602 = vand.u32 %v60, 4294901760
    %1603 = vmatpush1.msra.mxu0 %v1602
    %1604 = vmatprep.subr.mxu0 0.0
    %v1605 = vand.u32 %v61, 4294901760
    %1606 = vmatpush1.msra.mxu0 %v1605
    %1607 = vmatprep.subr.mxu0 0.0
    %v1608 = vand.u32 %v62, 4294901760
    %1609 = vmatpush1.msra.mxu0 %v1608
    %1610 = vmatprep.subr.mxu0 0.0
    %v1611 = vand.u32 %v63, 4294901760
    %1612 = vmatpush1.msra.mxu0 %v1611
    %1613 = vmatprep.subr.mxu0 0.0
    %v1614 = vand.u32 %v64, 4294901760
    %1615 = vmatpush1.msra.mxu0 %v1614
    %1616 = vmatprep.subr.mxu0 0.0
    %v1617 = vand.u32 %v65, 4294901760
    %1618 = vmatpush1.msra.mxu0 %v1617
    %1619 = vmatprep.subr.mxu0 0.0
    %v1620 = vand.u32 %v66, 4294901760
    %1621 = vmatpush1.msra.mxu0 %v1620
    %1622 = vmatprep.subr.mxu0 0.0
    %v1623 = vand.u32 %v67, 4294901760
    %1624 = vmatpush1.msra.mxu0 %v1623
    %1625 = vmatprep.subr.mxu0 0.0
    %v1626 = vand.u32 %v68, 4294901760
    %1627 = vmatpush1.msra.mxu0 %v1626
    %1628 = vmatprep.subr.mxu0 0.0
    %1629 = vmatpush1.msra.mxu0 0.0
    %1630 = vmatprep.subr.mxu0 0.0
    %1631 = vmatpush1.msra.mxu0 0.0
    %1632 = vmatprep.subr.mxu0 0.0
    %1633 = vmatpush1.msra.mxu0 0.0
    %1634 = vmatprep.subr.mxu0 0.0
    %1635 = vmatpush1.msra.mxu0 0.0
    %1636 = vmatprep.subr.mxu0 0.0
    %1637 = vmatpush1.msra.mxu0 0.0
    %1638 = vmatprep.subr.mxu0 0.0
    %1639 = vmatpush1.msra.mxu0 0.0
    %1640 = vmatprep.subr.mxu0 0.0
    %1641 = vmatpush1.msra.mxu0 0.0
    %1642 = vmatprep.subr.mxu0 0.0
    %1643 = vmatpush1.msra.mxu0 0.0
    %1644 = vmatprep.subr.mxu0 0.0
    %1645 = vmatpush1.msra.mxu0 0.0
    %1646 = vmatprep.subr.mxu0 0.0
    %1647 = vmatpush1.msra.mxu0 0.0
    %1648 = vmatprep.subr.mxu0 0.0
    %1649 = vmatpush1.msra.mxu0 0.0
    %1650 = vmatprep.subr.mxu0 0.0
    %1651 = vmatpush1.msra.mxu0 0.0
    %1652 = vmatprep.subr.mxu0 0.0
    %1653 = vmatpush1.msra.mxu0 0.0
    %1654 = vmatprep.subr.mxu0 0.0
    %1655 = vmatpush1.msra.mxu0 0.0
    %v1656 = vand.u32 %v120, 4294901760
    %1657 = vmatprep.mubr.f32.mxu0 %v1656
    %v1658 = vand.u32 %v114, 4294901760
    %1659 = vmatmul.mubr.f32.gmra.mrb[0].mxu0 %v1658
    %v1660 = vpop.f32.mrb[0].mxu0
    %v1661 = vadd.f32 %v1571, %v1660
    %v1662 = vpop.f32.mrb[0].mxu0
    %1663 = vdwg.mxu0
    %1664 = vst [vmem:[#allocation2] sm:$0xff] %v1661
    // Predicated region
    $region14: #{no_switch_wrapper_forward.1} parent=1 // pred_check
      _
    $region15: #{no_switch_wrapper_forward.1} parent=1 // pred_check_branch
      %1666 = sbr.rel (0) target = $region17
    $region16: #{no_switch_wrapper_forward.1} parent=1 // pred_region
      %s1668 = ssub.s32 128, 32
      %1669 = vsyncadd [#allocation3], %s1668
      %s1670 = sshll.u32 [#allocation2], 4
      %s1671 = int_to_ptr.vmem [resolvable:$true] %s1670
      %1676 = dma.vmem_to_hbm [thread:$0]  %s1671, 32, %s3, [#allocation3], 32, 32, 2
    $region17: #{no_switch_wrapper_forward.1} parent=1 // pred_fallthru
      _
    // Predicated region
    $region18: #{no_switch_wrapper_forward.1} parent=1 // pred_check
      _
    $region19: #{no_switch_wrapper_forward.1} parent=1 // pred_check_branch
      %1678 = sbr.rel (0) target = $region21
    $region20: #{no_switch_wrapper_forward.1} parent=1 // pred_region
      %1679 = dma.done [#allocation3], 128
    $region21: #{no_switch_wrapper_forward.1} parent=1 // pred_fallthru
      _
    %1680 = vsyncpa [#allocation3], 1

</llo_original>
